<compile_context>
chip_gen: v7x
topology: tpu7x:2x2x1
jax: 0.10.0
libtpu: 0.0.40
codegen_flags: <defaults>
</compile_context>

<pallas_src>
import functools
import math

import jax
import jax.numpy as jnp
from jax.experimental import pallas as pl
from jax.experimental.pallas import tpu as pltpu


def _layernorm(x, alpha, beta, eps=1e-6):
    # Matches PyTorch LayerNormalization: mean / *unbiased* std over last dim,
    # eps added to std (not var).  1/(std+eps) via the EUP approx reciprocal.
    d = x.shape[-1]
    mean = jnp.mean(x, axis=-1, keepdims=True)
    var = jnp.sum((x - mean) ** 2, axis=-1, keepdims=True) * (1.0 / (d - 1))
    inv = pl.reciprocal(jnp.sqrt(var) + eps, approx=True)
    return alpha * (x - mean) * inv + beta


def encoder_block_kernel(lens_ref,                    # SMEM (B,) int32 (scalar prefetch)
                         x_ref,                       # VMEM (1, S, D) f32 (full sequence)
                         wqkv_ref, bqkv_ref,          # (D, 3D) bf16, (1, 3D) f32
                         wo_ref, bo_ref,              # (D, D) bf16,  (1, D) f32
                         w1_ref, b1_ref,              # (D, FF) bf16, (1, FF) f32
                         w2_ref, b2_ref,              # (FF, D) bf16, (1, D) f32
                         ln_ref,                      # SMEM (4,) f32: a1, b1, a2, b2
                         out_ref,                     # VMEM (1, Tq, D) f32
                         q_scr, k_scr, v_scr,         # VMEM (H, S, dk) bf16 scratch
                         *, num_heads):
    b = pl.program_id(0)
    qi = pl.program_id(1)

    S = x_ref.shape[1]
    D = x_ref.shape[2]
    Tq = out_ref.shape[1]
    H = num_heads
    dk = D // H
    bf = jnp.bfloat16

    alpha1 = ln_ref[0]
    beta1 = ln_ref[1]
    alpha2 = ln_ref[2]
    beta2 = ln_ref[3]
    length = lens_ref[b]                              # number of valid keys

    # ---------- per-batch Q/K/V projection, cached across query tiles ----------
    @pl.when(qi == 0)
    def _():
        x_full = x_ref[0]                             # (S, D) f32
        xn = _layernorm(x_full, alpha1, beta1)        # (S, D) f32
        # Fused QKV: one lane-dense (S,D)@(D,3D) matmul, f32 accumulation.
        qkv = jnp.dot(xn.astype(bf), wqkv_ref[...],
                      preferred_element_type=jnp.float32) + bqkv_ref[0]   # (S, 3D)
        q_all = qkv[:, :D]
        k_all = qkv[:, D:2 * D]
        v_all = qkv[:, 2 * D:]
        # Head-major layout (H, S, dk), bf16 at the MXU boundary.
        q_scr[...] = q_all.reshape(S, H, dk).transpose(1, 0, 2).astype(bf)
        k_scr[...] = k_all.reshape(S, H, dk).transpose(1, 0, 2).astype(bf)
        v_scr[...] = v_all.reshape(S, H, dk).transpose(1, 0, 2).astype(bf)

    # ---------- residual 1: x + SelfAttention(LayerNorm(x)) ----------
    q0 = pl.multiple_of(qi * Tq, Tq)
    q = q_scr[:, pl.ds(q0, Tq), :]                    # (H, Tq, dk) bf16

    scale = 1.0 / math.sqrt(dk)
    s = jnp.einsum('hqe,hke->hqk', q, k_scr[...],
                   preferred_element_type=jnp.float32) * scale            # (H, Tq, S)

    # Key-padding mask rebuilt in-kernel (no dense S x S mask DMA).
    kmask = jax.lax.broadcasted_iota(jnp.int32, (1, 1, S), 2) < length
    s = jnp.where(kmask, s, -1e9)

    s_max = jnp.max(s, axis=-1, keepdims=True)
    p = jnp.exp(s - s_max)
    p = p * pl.reciprocal(jnp.sum(p, axis=-1, keepdims=True), approx=True)

    ctx = jnp.einsum('hqk,hkd->hqd', p.astype(bf), v_scr[...],
                     preferred_element_type=jnp.float32)                  # (H, Tq, dk)

    # Head-concat then one deep (Tq,D)@(D,D) output projection on the MXU.
    ctx2 = ctx.transpose(1, 0, 2).reshape(Tq, D)
    attn = jnp.dot(ctx2.astype(bf), wo_ref[...],
                   preferred_element_type=jnp.float32) + bo_ref[0]        # (Tq, D)

    xq = x_ref[0, pl.ds(q0, Tq), :]                   # original (un-normalized) rows
    h1 = xq + attn                                    # dropout -> identity (eval)

    # ---------- residual 2: h1 + FFN(LayerNorm(h1)) ----------
    xn2 = _layernorm(h1, alpha2, beta2)
    hidden = jnp.maximum(
        jnp.dot(xn2.astype(bf), w1_ref[...],
                preferred_element_type=jnp.float32) + b1_ref[0], 0.0)
    ff = jnp.dot(hidden.astype(bf), w2_ref[...],
                 preferred_element_type=jnp.float32) + b2_ref[0]
    out_ref[0] = h1 + ff


def _vmem_limit_bytes():
    # Generation-aware VMEM budget: ~75% of physical per-core VMEM, capped.
    cap = 128 * 1024 * 1024
    try:
        cap = int(pltpu.get_tpu_info().vmem_capacity_bytes)
    except Exception:
        pass
    return min((cap * 3) // 4, 100 * 1024 * 1024)


def encoder_block(x, key_lengths, params, num_heads, block_q=None):
    """x: (B, S, D) f32.  key_lengths: (B,) int32 valid key counts per batch."""
    B, S, D = x.shape
    H = num_heads
    dk = D // H
    FF = params['w1'].shape[1]

    if block_q is None:
        # Sane default query tile (not S): safe on the smallest-VMEM target.
        for cand in (256, 128):
            if S % cand == 0:
                block_q = cand
                break
        else:
            block_q = S
    assert S % block_q == 0 and (block_q == S or block_q % 8 == 0)
    nq = S // block_q

    bf = jnp.bfloat16
    # Fused projection weights / lane-dense bias rows (built once, outside kernel).
    wqkv = jnp.concatenate([params['wq'], params['wk'], params['wv']],
                           axis=1).astype(bf)                            # (D, 3D)
    bqkv = jnp.concatenate([params['bq'], params['bk'], params['bv']],
                           axis=1).astype(jnp.float32)                   # (1, 3D)
    wo = params['wo'].astype(bf)                                         # (D, D)
    bo = params['bo'].astype(jnp.float32)                                # (1, D)
    w1 = params['w1'].astype(bf)                                         # (D, FF)
    b1 = params['b1'].astype(jnp.float32)                                # (1, FF)
    w2 = params['w2'].astype(bf)                                         # (FF, D)
    b2 = params['b2'].astype(jnp.float32)                                # (1, D)
    ln = params['ln'].reshape(-1).astype(jnp.float32)                    # (4,)

    weights = (wqkv, bqkv, wo, bo, w1, b1, w2, b2)

    def wspec(a):
        nd = a.ndim
        return pl.BlockSpec(a.shape, lambda b, qi, lens, nd=nd: (0,) * nd)

    in_specs = (
        [pl.BlockSpec((1, S, D), lambda b, qi, lens: (b, 0, 0))]         # x (full seq)
        + [wspec(w) for w in weights]
        + [pl.BlockSpec(memory_space=pltpu.MemorySpace.SMEM)]            # ln scalars
    )

    grid_spec = pltpu.PrefetchScalarGridSpec(
        num_scalar_prefetch=1,                                           # key_lengths
        grid=(B, nq),
        in_specs=in_specs,
        out_specs=pl.BlockSpec((1, block_q, D), lambda b, qi, lens: (b, qi, 0)),
        scratch_shapes=[pltpu.VMEM((H, S, dk), bf),                      # Q cache
                        pltpu.VMEM((H, S, dk), bf),                      # K cache
                        pltpu.VMEM((H, S, dk), bf)],                     # V cache
    )

    kern = functools.partial(encoder_block_kernel, num_heads=H)
    return pl.pallas_call(
        kern,
        out_shape=jax.ShapeDtypeStruct((B, S, D), jnp.float32),
        grid_spec=grid_spec,
        compiler_params=pltpu.CompilerParams(
            # batch axis parallel (megacore), query-tile axis arbitrary so the
            # per-batch Q/K/V scratch cache is valid across query tiles.
            dimension_semantics=("parallel", "arbitrary"),
            vmem_limit_bytes=_vmem_limit_bytes()),
    )(key_lengths.astype(jnp.int32), x, *weights, ln)


# ---------------------- pure-JAX reference (for verification) ----------------------
def ref_encoder_block(x, key_lengths, params, num_heads, matmul_dtype=jnp.float32):
    dt = matmul_dtype

    def mm(a, b):
        return jnp.dot(a.astype(dt), b.astype(dt), preferred_element_type=jnp.float32)

    def ln(t, a, b, eps=1e-6):
        d = t.shape[-1]
        mean = jnp.mean(t, axis=-1, keepdims=True)
        std = jnp.sqrt(jnp.sum((t - mean) ** 2, axis=-1, keepdims=True) / (d - 1))
        return a * (t - mean) / (std + eps) + b

    B, S, D = x.shape
    H = num_heads
    dk = D // H
    a1, b1_, a2, b2_ = params['ln'].reshape(-1)

    xn = ln(x, a1, b1_)
    q = mm(xn, params['wq']) + params['bq'][0]
    k = mm(xn, params['wk']) + params['bk'][0]
    v = mm(xn, params['wv']) + params['bv'][0]
    q = q.reshape(B, S, H, dk).transpose(0, 2, 1, 3)
    k = k.reshape(B, S, H, dk).transpose(0, 2, 1, 3)
    v = v.reshape(B, S, H, dk).transpose(0, 2, 1, 3)
    s = jnp.einsum('bhqe,bhke->bhqk', q.astype(dt), k.astype(dt),
                   preferred_element_type=jnp.float32) / math.sqrt(dk)
    kmask = jnp.arange(S)[None, :] < key_lengths[:, None]            # (B, S)
    s = jnp.where(kmask[:, None, None, :], s, -1e9)
    p = jax.nn.softmax(s, axis=-1)
    ctx = jnp.einsum('bhqk,bhkd->bhqd', p.astype(dt), v.astype(dt),
                     preferred_element_type=jnp.float32)
    ctx = ctx.transpose(0, 2, 1, 3).reshape(B, S, D)
    attn = mm(ctx, params['wo']) + params['bo'][0]
    h1 = x + attn

    xn2 = ln(h1, a2, b2_)
    hidden = jnp.maximum(mm(xn2, params['w1']) + params['b1'][0], 0.0)
    ff = mm(hidden, params['w2']) + params['b2'][0]
    return h1 + ff


if __name__ == "__main__":
    B, S, D, H, FF = 2, 8, 32, 4, 64

    key = jax.random.PRNGKey(0)
    kx, kq, kk, kv, ko, k1, k2, _ = jax.random.split(key, 8)

    def linear_init(k, fan_in, fan_out):
        kw, kb = jax.random.split(k)
        bound = 1.0 / math.sqrt(fan_in)
        W = jax.random.uniform(kw, (fan_in, fan_out), jnp.float32, -bound, bound)
        b = jax.random.uniform(kb, (1, fan_out), jnp.float32, -bound, bound)
        return W, b

    wq, bq = linear_init(kq, D, D)
    wk, bk = linear_init(kk, D, D)
    wv, bv = linear_init(kv, D, D)
    wo, bo = linear_init(ko, D, D)
    w1, b1 = linear_init(k1, D, FF)
    w2, b2 = linear_init(k2, FF, D)
    ln_params = jnp.array([1.0, 0.0, 1.0, 0.0], dtype=jnp.float32)   # a1, b1, a2, b2

    params = dict(wq=wq, bq=bq, wk=wk, bk=bk, wv=wv, bv=bv, wo=wo, bo=bo,
                  w1=w1, b1=b1, w2=w2, b2=b2, ln=ln_params)

    x = jax.random.normal(kx, (B, S, D), dtype=jnp.float32)

    # padding-style src_mask: batch 0 attends to all 8 keys, batch 1 to first 6.
    key_lengths = jnp.array([8, 6], dtype=jnp.int32)

    out = encoder_block(x, key_lengths, params, num_heads=H)
    out = jax.block_until_ready(out)

    assert out.shape == (B, S, D) and out.dtype == jnp.float32

    # Reference with the same precision recipe (bf16 matmul inputs, f32 accum):
    ref_bf16 = ref_encoder_block(x, key_lengths, params, H, matmul_dtype=jnp.bfloat16)
    assert jnp.allclose(out, ref_bf16, rtol=2e-2, atol=2e-2), \
        "Pallas kernel mismatch vs bf16-recipe reference"

    # Sanity check against the full-f32 reference (bf16-level tolerance).
    ref_f32 = ref_encoder_block(x, key_lengths, params, H, matmul_dtype=jnp.float32)
    assert jnp.allclose(out, ref_f32, rtol=1e-1, atol=1e-1), \
        "Pallas kernel mismatch vs f32 reference"

    print("KERNEL_OK")
</pallas_src>

<mosaic_0001>
module attributes {stable_mosaic.version = 11 : i64} {
  func.func @encoder_block_kernel(%arg0: i32, %arg1: i32, %arg2: memref<2xi32, #tpu.memory_space<smem>>, %arg3: memref<1x8x32xf32, #tpu.memory_space<vmem>>, %arg4: memref<32x96xbf16, #tpu.memory_space<vmem>>, %arg5: memref<1x96xf32, #tpu.memory_space<vmem>>, %arg6: memref<32x32xbf16, #tpu.memory_space<vmem>>, %arg7: memref<1x32xf32, #tpu.memory_space<vmem>>, %arg8: memref<32x64xbf16, #tpu.memory_space<vmem>>, %arg9: memref<1x64xf32, #tpu.memory_space<vmem>>, %arg10: memref<64x32xbf16, #tpu.memory_space<vmem>>, %arg11: memref<1x32xf32, #tpu.memory_space<vmem>>, %arg12: memref<4xf32, #tpu.memory_space<smem>>, %arg13: memref<1x8x32xf32, #tpu.memory_space<vmem>>, %arg14: memref<4x8x8xbf16, #tpu.memory_space<vmem>>, %arg15: memref<4x8x8xbf16, #tpu.memory_space<vmem>>, %arg16: memref<4x8x8xbf16, #tpu.memory_space<vmem>>) attributes {dimension_semantics = [#tpu.dimension_semantics<parallel>, #tpu.dimension_semantics<arbitrary>], iteration_bounds = array<i64: 2, 1>, scalar_prefetch = 1 : i64, scratch_operands = 3 : i64, tpu.core_type = #tpu.core_type<tc>, window_params = [{transform_indices = @transform_0, window_bounds = array<i64: 1, 8, 32>}, {pipeline_mode = #tpu.pipeline_mode<synchronous>, transform_indices = @transform_1, window_bounds = array<i64: 32, 96>}, {pipeline_mode = #tpu.pipeline_mode<synchronous>, transform_indices = @transform_2, window_bounds = array<i64: 1, 96>}, {pipeline_mode = #tpu.pipeline_mode<synchronous>, transform_indices = @transform_3, window_bounds = array<i64: 32, 32>}, {pipeline_mode = #tpu.pipeline_mode<synchronous>, transform_indices = @transform_4, window_bounds = array<i64: 1, 32>}, {pipeline_mode = #tpu.pipeline_mode<synchronous>, transform_indices = @transform_5, window_bounds = array<i64: 32, 64>}, {pipeline_mode = #tpu.pipeline_mode<synchronous>, transform_indices = @transform_6, window_bounds = array<i64: 1, 64>}, {pipeline_mode = #tpu.pipeline_mode<synchronous>, transform_indices = @transform_7, window_bounds = array<i64: 64, 32>}, {pipeline_mode = #tpu.pipeline_mode<synchronous>, transform_indices = @transform_8, window_bounds = array<i64: 1, 32>}, {transform_indices = @transform_9, window_bounds = array<i64: 4>}, {transform_indices = @transform_10, window_bounds = array<i64: 1, 8, 32>}]} {
    %c0 = arith.constant 0 : index
    %0 = memref.load %arg12[%c0] : memref<4xf32, #tpu.memory_space<smem>>
    %c1 = arith.constant 1 : index
    %1 = memref.load %arg12[%c1] : memref<4xf32, #tpu.memory_space<smem>>
    %c2 = arith.constant 2 : index
    %2 = memref.load %arg12[%c2] : memref<4xf32, #tpu.memory_space<smem>>
    %c3 = arith.constant 3 : index
    %3 = memref.load %arg12[%c3] : memref<4xf32, #tpu.memory_space<smem>>
    %4 = arith.index_cast %arg0 : i32 to index
    %5 = memref.load %arg2[%4] : memref<2xi32, #tpu.memory_space<smem>>
    %c0_i32 = arith.constant 0 : i32
    %6 = arith.cmpi eq, %arg1, %c0_i32 : i32
    %7 = arith.extui %6 : i1 to i32
    %c0_i32_0 = arith.constant 0 : i32
    %8 = arith.cmpi ne, %7, %c0_i32_0 : i32
    scf.if %8 {
      %c0_40 = arith.constant 0 : index
      %c0_41 = arith.constant 0 : index
      %c0_42 = arith.constant 0 : index
      %96 = vector.load %arg3[%c0_40, %c0_41, %c0_42] : memref<1x8x32xf32, #tpu.memory_space<vmem>>, vector<1x8x32xf32>
      %97 = vector.shape_cast %96 : vector<1x8x32xf32> to vector<8x32xf32>
      %cst_43 = arith.constant dense<0.000000e+00> : vector<8xf32>
      %98 = vector.multi_reduction <add>, %97, %cst_43 [1] : vector<8x32xf32> to vector<8xf32>
      %99 = vector.shape_cast %98 : vector<8xf32> to vector<8x1xf32>
      %cst_44 = arith.constant 3.200000e+01 : f32
      %100 = vector.broadcast %cst_44 : f32 to vector<8x1xf32>
      %101 = arith.divf %99, %100 : vector<8x1xf32>
      %102 = vector.broadcast %101 : vector<8x1xf32> to vector<8x32xf32>
      %103 = arith.subf %97, %102 : vector<8x32xf32>
      %104 = arith.mulf %103, %103 : vector<8x32xf32>
      %cst_45 = arith.constant dense<0.000000e+00> : vector<8xf32>
      %105 = vector.multi_reduction <add>, %104, %cst_45 [1] : vector<8x32xf32> to vector<8xf32>
      %106 = vector.shape_cast %105 : vector<8xf32> to vector<8x1xf32>
      %cst_46 = arith.constant 0.0322580636 : f32
      %107 = vector.broadcast %cst_46 : f32 to vector<8x1xf32>
      %108 = arith.mulf %106, %107 : vector<8x1xf32>
      %109 = math.sqrt %108 : vector<8x1xf32>
      %cst_47 = arith.constant 9.99999997E-7 : f32
      %110 = vector.broadcast %cst_47 : f32 to vector<8x1xf32>
      %111 = arith.addf %109, %110 : vector<8x1xf32>
      %112 = tpu.reciprocal %111 {approx = true} : vector<8x1xf32> -> vector<8x1xf32>
      %113 = vector.broadcast %101 : vector<8x1xf32> to vector<8x32xf32>
      %114 = arith.subf %97, %113 : vector<8x32xf32>
      %115 = vector.broadcast %0 : f32 to vector<8x32xf32>
      %116 = arith.mulf %115, %114 : vector<8x32xf32>
      %117 = vector.broadcast %112 : vector<8x1xf32> to vector<8x32xf32>
      %118 = arith.mulf %116, %117 : vector<8x32xf32>
      %119 = vector.broadcast %1 : f32 to vector<8x32xf32>
      %120 = arith.addf %118, %119 : vector<8x32xf32>
      %121 = arith.truncf %120 : vector<8x32xf32> to vector<8x32xbf16>
      %c0_48 = arith.constant 0 : index
      %c0_49 = arith.constant 0 : index
      %122 = vector.load %arg4[%c0_48, %c0_49] : memref<32x96xbf16, #tpu.memory_space<vmem>>, vector<32x96xbf16>
      %cst_50 = arith.constant dense<0.000000e+00> : vector<8x96xf32>
      %123 = tpu.matmul %121, %122, %cst_50 {dimension_numbers = #tpu.dot_dimension_numbers<[1], [0], [0], [1], [0, 0, 1, 1], [], []>} : vector<8x32xbf16>, vector<32x96xbf16>, vector<8x96xf32> -> vector<8x96xf32>
      %c0_51 = arith.constant 0 : index
      %c0_52 = arith.constant 0 : index
      %124 = vector.load %arg5[%c0_51, %c0_52] : memref<1x96xf32, #tpu.memory_space<vmem>>, vector<1x96xf32>
      %125 = vector.shape_cast %124 : vector<1x96xf32> to vector<96xf32>
      %126 = vector.shape_cast %125 : vector<96xf32> to vector<1x96xf32>
      %127 = vector.broadcast %126 : vector<1x96xf32> to vector<8x96xf32>
      %128 = arith.addf %123, %127 : vector<8x96xf32>
      %129 = vector.extract_strided_slice %128 {offsets = [0, 0], sizes = [8, 32], strides = [1, 1]} : vector<8x96xf32> to vector<8x32xf32>
      %130 = vector.extract_strided_slice %128 {offsets = [0, 32], sizes = [8, 32], strides = [1, 1]} : vector<8x96xf32> to vector<8x32xf32>
      %131 = vector.extract_strided_slice %128 {offsets = [0, 64], sizes = [8, 32], strides = [1, 1]} : vector<8x96xf32> to vector<8x32xf32>
      %132 = vector.shape_cast %129 : vector<8x32xf32> to vector<8x4x8xf32>
      %133 = tpu.transpose %132, [1, 0, 2] : vector<8x4x8xf32> -> vector<4x8x8xf32>
      %134 = arith.truncf %133 : vector<4x8x8xf32> to vector<4x8x8xbf16>
      %c0_53 = arith.constant 0 : index
      %c0_54 = arith.constant 0 : index
      %c0_55 = arith.constant 0 : index
      %135 = vector.load %arg14[%c0_53, %c0_54, %c0_55] : memref<4x8x8xbf16, #tpu.memory_space<vmem>>, vector<4x8x8xbf16>
      tpu.vector_store %arg14[%c0_53, %c0_54, %c0_55], %134 {strides = array<i32>} : memref<4x8x8xbf16, #tpu.memory_space<vmem>>, vector<4x8x8xbf16>,
      %136 = vector.shape_cast %130 : vector<8x32xf32> to vector<8x4x8xf32>
      %137 = tpu.transpose %136, [1, 0, 2] : vector<8x4x8xf32> -> vector<4x8x8xf32>
      %138 = arith.truncf %137 : vector<4x8x8xf32> to vector<4x8x8xbf16>
      %c0_56 = arith.constant 0 : index
      %c0_57 = arith.constant 0 : index
      %c0_58 = arith.constant 0 : index
      %139 = vector.load %arg15[%c0_56, %c0_57, %c0_58] : memref<4x8x8xbf16, #tpu.memory_space<vmem>>, vector<4x8x8xbf16>
      tpu.vector_store %arg15[%c0_56, %c0_57, %c0_58], %138 {strides = array<i32>} : memref<4x8x8xbf16, #tpu.memory_space<vmem>>, vector<4x8x8xbf16>,
      %140 = vector.shape_cast %131 : vector<8x32xf32> to vector<8x4x8xf32>
      %141 = tpu.transpose %140, [1, 0, 2] : vector<8x4x8xf32> -> vector<4x8x8xf32>
      %142 = arith.truncf %141 : vector<4x8x8xf32> to vector<4x8x8xbf16>
      %c0_59 = arith.constant 0 : index
      %c0_60 = arith.constant 0 : index
      %c0_61 = arith.constant 0 : index
      %143 = vector.load %arg16[%c0_59, %c0_60, %c0_61] : memref<4x8x8xbf16, #tpu.memory_space<vmem>>, vector<4x8x8xbf16>
      tpu.vector_store %arg16[%c0_59, %c0_60, %c0_61], %142 {strides = array<i32>} : memref<4x8x8xbf16, #tpu.memory_space<vmem>>, vector<4x8x8xbf16>,
    } else {
    }
    %c8_i32 = arith.constant 8 : i32
    %9 = arith.muli %arg1, %c8_i32 : i32
    %10 = tpu.assume_multiple %9, 8 : i32
    %c0_1 = arith.constant 0 : index
    %11 = arith.index_cast %10 : i32 to index
    %c0_2 = arith.constant 0 : index
    %12 = vector.load %arg14[%c0_1, %11, %c0_2] : memref<4x8x8xbf16, #tpu.memory_space<vmem>>, vector<4x8x8xbf16>
    %c0_3 = arith.constant 0 : index
    %c0_4 = arith.constant 0 : index
    %c0_5 = arith.constant 0 : index
    %13 = vector.load %arg15[%c0_3, %c0_4, %c0_5] : memref<4x8x8xbf16, #tpu.memory_space<vmem>>, vector<4x8x8xbf16>
    "tpu.trace_start"() <{level = 10 : i32, message = "hqe,hke->hqk"}> : () -> ()
    %cst = arith.constant dense<0.000000e+00> : vector<4x8x8xf32>
    %14 = tpu.matmul %12, %13, %cst {dimension_numbers = #tpu.dot_dimension_numbers<[2], [2], [1], [1], [0, 0, 0, 1, 1, 1], [0], [0]>} : vector<4x8x8xbf16>, vector<4x8x8xbf16>, vector<4x8x8xf32> -> vector<4x8x8xf32>
    "tpu.trace_stop"() : () -> ()
    %cst_6 = arith.constant 0.353553385 : f32
    %15 = vector.broadcast %cst_6 : f32 to vector<4x8x8xf32>
    %16 = arith.mulf %14, %15 : vector<4x8x8xf32>
    %17 = tpu.iota {dimensions = array<i32: 2>} : vector<1x1x8xi32>
    %18 = vector.broadcast %5 : i32 to vector<1x1x8xi32>
    %19 = arith.cmpi slt, %17, %18 : vector<1x1x8xi32>
    %cst_7 = arith.constant -1.000000e+09 : f32
    %20 = vector.shape_cast %19 : vector<1x1x8xi1> to vector<1x1x8xi1>
    %21 = vector.broadcast %20 : vector<1x1x8xi1> to vector<4x8x8xi1>
    %22 = vector.broadcast %cst_7 : f32 to vector<4x8x8xf32>
    %23 = arith.select %21, %16, %22 : vector<4x8x8xi1>, vector<4x8x8xf32>
    %cst_8 = arith.constant dense<0xFF800000> : vector<4x8xf32>
    %24 = vector.multi_reduction <maximumf>, %23, %cst_8 [2] : vector<4x8x8xf32> to vector<4x8xf32>
    %25 = vector.shape_cast %24 : vector<4x8xf32> to vector<4x8x1xf32>
    %26 = vector.broadcast %25 : vector<4x8x1xf32> to vector<4x8x8xf32>
    %27 = arith.subf %23, %26 : vector<4x8x8xf32>
    %28 = math.exp %27 : vector<4x8x8xf32>
    %cst_9 = arith.constant dense<0.000000e+00> : vector<4x8xf32>
    %29 = vector.multi_reduction <add>, %28, %cst_9 [2] : vector<4x8x8xf32> to vector<4x8xf32>
    %30 = vector.shape_cast %29 : vector<4x8xf32> to vector<4x8x1xf32>
    %31 = tpu.reciprocal %30 {approx = true} : vector<4x8x1xf32> -> vector<4x8x1xf32>
    %32 = vector.broadcast %31 : vector<4x8x1xf32> to vector<4x8x8xf32>
    %33 = arith.mulf %28, %32 : vector<4x8x8xf32>
    %34 = arith.truncf %33 : vector<4x8x8xf32> to vector<4x8x8xbf16>
    %c0_10 = arith.constant 0 : index
    %c0_11 = arith.constant 0 : index
    %c0_12 = arith.constant 0 : index
    %35 = vector.load %arg16[%c0_10, %c0_11, %c0_12] : memref<4x8x8xbf16, #tpu.memory_space<vmem>>, vector<4x8x8xbf16>
    "tpu.trace_start"() <{level = 10 : i32, message = "hqk,hkd->hqd"}> : () -> ()
    %cst_13 = arith.constant dense<0.000000e+00> : vector<4x8x8xf32>
    %36 = tpu.matmul %34, %35, %cst_13 {dimension_numbers = #tpu.dot_dimension_numbers<[2], [1], [1], [2], [0, 0, 0, 1, 1, 2], [0], [0]>} : vector<4x8x8xbf16>, vector<4x8x8xbf16>, vector<4x8x8xf32> -> vector<4x8x8xf32>
    "tpu.trace_stop"() : () -> ()
    %37 = tpu.transpose %36, [1, 0, 2] : vector<4x8x8xf32> -> vector<8x4x8xf32>
    %38 = vector.shape_cast %37 : vector<8x4x8xf32> to vector<8x32xf32>
    %39 = arith.truncf %38 : vector<8x32xf32> to vector<8x32xbf16>
    %c0_14 = arith.constant 0 : index
    %c0_15 = arith.constant 0 : index
    %40 = vector.load %arg6[%c0_14, %c0_15] : memref<32x32xbf16, #tpu.memory_space<vmem>>, vector<32x32xbf16>
    %cst_16 = arith.constant dense<0.000000e+00> : vector<8x32xf32>
    %41 = tpu.matmul %39, %40, %cst_16 {dimension_numbers = #tpu.dot_dimension_numbers<[1], [0], [0], [1], [0, 0, 1, 1], [], []>} : vector<8x32xbf16>, vector<32x32xbf16>, vector<8x32xf32> -> vector<8x32xf32>
    %c0_17 = arith.constant 0 : index
    %c0_18 = arith.constant 0 : index
    %42 = vector.load %arg7[%c0_17, %c0_18] : memref<1x32xf32, #tpu.memory_space<vmem>>, vector<1x32xf32>
    %43 = vector.shape_cast %42 : vector<1x32xf32> to vector<32xf32>
    %44 = vector.shape_cast %43 : vector<32xf32> to vector<1x32xf32>
    %45 = vector.broadcast %44 : vector<1x32xf32> to vector<8x32xf32>
    %46 = arith.addf %41, %45 : vector<8x32xf32>
    %c0_19 = arith.constant 0 : index
    %47 = arith.index_cast %10 : i32 to index
    %c0_20 = arith.constant 0 : index
    %48 = vector.load %arg3[%c0_19, %47, %c0_20] : memref<1x8x32xf32, #tpu.memory_space<vmem>>, vector<1x8x32xf32>
    %49 = vector.shape_cast %48 : vector<1x8x32xf32> to vector<8x32xf32>
    %50 = arith.addf %49, %46 : vector<8x32xf32>
    %cst_21 = arith.constant dense<0.000000e+00> : vector<8xf32>
    %51 = vector.multi_reduction <add>, %50, %cst_21 [1] : vector<8x32xf32> to vector<8xf32>
    %52 = vector.shape_cast %51 : vector<8xf32> to vector<8x1xf32>
    %cst_22 = arith.constant 3.200000e+01 : f32
    %53 = vector.broadcast %cst_22 : f32 to vector<8x1xf32>
    %54 = arith.divf %52, %53 : vector<8x1xf32>
    %55 = vector.broadcast %54 : vector<8x1xf32> to vector<8x32xf32>
    %56 = arith.subf %50, %55 : vector<8x32xf32>
    %57 = arith.mulf %56, %56 : vector<8x32xf32>
    %cst_23 = arith.constant dense<0.000000e+00> : vector<8xf32>
    %58 = vector.multi_reduction <add>, %57, %cst_23 [1] : vector<8x32xf32> to vector<8xf32>
    %59 = vector.shape_cast %58 : vector<8xf32> to vector<8x1xf32>
    %cst_24 = arith.constant 0.0322580636 : f32
    %60 = vector.broadcast %cst_24 : f32 to vector<8x1xf32>
    %61 = arith.mulf %59, %60 : vector<8x1xf32>
    %62 = math.sqrt %61 : vector<8x1xf32>
    %cst_25 = arith.constant 9.99999997E-7 : f32
    %63 = vector.broadcast %cst_25 : f32 to vector<8x1xf32>
    %64 = arith.addf %62, %63 : vector<8x1xf32>
    %65 = tpu.reciprocal %64 {approx = true} : vector<8x1xf32> -> vector<8x1xf32>
    %66 = vector.broadcast %54 : vector<8x1xf32> to vector<8x32xf32>
    %67 = arith.subf %50, %66 : vector<8x32xf32>
    %68 = vector.broadcast %2 : f32 to vector<8x32xf32>
    %69 = arith.mulf %68, %67 : vector<8x32xf32>
    %70 = vector.broadcast %65 : vector<8x1xf32> to vector<8x32xf32>
    %71 = arith.mulf %69, %70 : vector<8x32xf32>
    %72 = vector.broadcast %3 : f32 to vector<8x32xf32>
    %73 = arith.addf %71, %72 : vector<8x32xf32>
    %74 = arith.truncf %73 : vector<8x32xf32> to vector<8x32xbf16>
    %c0_26 = arith.constant 0 : index
    %c0_27 = arith.constant 0 : index
    %75 = vector.load %arg8[%c0_26, %c0_27] : memref<32x64xbf16, #tpu.memory_space<vmem>>, vector<32x64xbf16>
    %cst_28 = arith.constant dense<0.000000e+00> : vector<8x64xf32>
    %76 = tpu.matmul %74, %75, %cst_28 {dimension_numbers = #tpu.dot_dimension_numbers<[1], [0], [0], [1], [0, 0, 1, 1], [], []>} : vector<8x32xbf16>, vector<32x64xbf16>, vector<8x64xf32> -> vector<8x64xf32>
    %c0_29 = arith.constant 0 : index
    %c0_30 = arith.constant 0 : index
    %77 = vector.load %arg9[%c0_29, %c0_30] : memref<1x64xf32, #tpu.memory_space<vmem>>, vector<1x64xf32>
    %78 = vector.shape_cast %77 : vector<1x64xf32> to vector<64xf32>
    %79 = vector.shape_cast %78 : vector<64xf32> to vector<1x64xf32>
    %80 = vector.broadcast %79 : vector<1x64xf32> to vector<8x64xf32>
    %81 = arith.addf %76, %80 : vector<8x64xf32>
    %cst_31 = arith.constant 0.000000e+00 : f32
    %82 = vector.broadcast %cst_31 : f32 to vector<8x64xf32>
    %83 = arith.maximumf %81, %82 : vector<8x64xf32>
    %84 = arith.truncf %83 : vector<8x64xf32> to vector<8x64xbf16>
    %c0_32 = arith.constant 0 : index
    %c0_33 = arith.constant 0 : index
    %85 = vector.load %arg10[%c0_32, %c0_33] : memref<64x32xbf16, #tpu.memory_space<vmem>>, vector<64x32xbf16>
    %cst_34 = arith.constant dense<0.000000e+00> : vector<8x32xf32>
    %86 = tpu.matmul %84, %85, %cst_34 {dimension_numbers = #tpu.dot_dimension_numbers<[1], [0], [0], [1], [0, 0, 1, 1], [], []>} : vector<8x64xbf16>, vector<64x32xbf16>, vector<8x32xf32> -> vector<8x32xf32>
    %c0_35 = arith.constant 0 : index
    %c0_36 = arith.constant 0 : index
    %87 = vector.load %arg11[%c0_35, %c0_36] : memref<1x32xf32, #tpu.memory_space<vmem>>, vector<1x32xf32>
    %88 = vector.shape_cast %87 : vector<1x32xf32> to vector<32xf32>
    %89 = vector.shape_cast %88 : vector<32xf32> to vector<1x32xf32>
    %90 = vector.broadcast %89 : vector<1x32xf32> to vector<8x32xf32>
    %91 = arith.addf %86, %90 : vector<8x32xf32>
    %92 = arith.addf %50, %91 : vector<8x32xf32>
    %c0_37 = arith.constant 0 : index
    %c0_38 = arith.constant 0 : index
    %c0_39 = arith.constant 0 : index
    %93 = vector.load %arg13[%c0_37, %c0_38, %c0_39] : memref<1x8x32xf32, #tpu.memory_space<vmem>>, vector<1x8x32xf32>
    %94 = vector.shape_cast %93 : vector<1x8x32xf32> to vector<8x32xf32>
    %95 = vector.shape_cast %92 : vector<8x32xf32> to vector<1x8x32xf32>
    tpu.vector_store %arg13[%c0_37, %c0_38, %c0_39], %95 {strides = array<i32>} : memref<1x8x32xf32, #tpu.memory_space<vmem>>, vector<1x8x32xf32>,
    return
  }
  func.func @transform_0(%arg0: i32, %arg1: i32, %arg2: memref<2xi32, #tpu.memory_space<smem>>) -> (i32, i32, i32) {
    %c0_i32 = arith.constant 0 : i32
    %c0_i32_0 = arith.constant 0 : i32
    %c0_i32_1 = arith.constant 0 : i32
    return %arg0, %c0_i32, %c0_i32_0 : i32, i32, i32
  }
  func.func @transform_1(%arg0: i32, %arg1: i32, %arg2: memref<2xi32, #tpu.memory_space<smem>>) -> (i32, i32) {
    %c0_i32 = arith.constant 0 : i32
    %c0_i32_0 = arith.constant 0 : i32
    %c0_i32_1 = arith.constant 0 : i32
    return %c0_i32, %c0_i32_0 : i32, i32
  }
  func.func @transform_2(%arg0: i32, %arg1: i32, %arg2: memref<2xi32, #tpu.memory_space<smem>>) -> (i32, i32) {
    %c0_i32 = arith.constant 0 : i32
    %c0_i32_0 = arith.constant 0 : i32
    %c0_i32_1 = arith.constant 0 : i32
    return %c0_i32, %c0_i32_0 : i32, i32
  }
  func.func @transform_3(%arg0: i32, %arg1: i32, %arg2: memref<2xi32, #tpu.memory_space<smem>>) -> (i32, i32) {
    %c0_i32 = arith.constant 0 : i32
    %c0_i32_0 = arith.constant 0 : i32
    %c0_i32_1 = arith.constant 0 : i32
    return %c0_i32, %c0_i32_0 : i32, i32
  }
  func.func @transform_4(%arg0: i32, %arg1: i32, %arg2: memref<2xi32, #tpu.memory_space<smem>>) -> (i32, i32) {
    %c0_i32 = arith.constant 0 : i32
    %c0_i32_0 = arith.constant 0 : i32
    %c0_i32_1 = arith.constant 0 : i32
    return %c0_i32, %c0_i32_0 : i32, i32
  }
  func.func @transform_5(%arg0: i32, %arg1: i32, %arg2: memref<2xi32, #tpu.memory_space<smem>>) -> (i32, i32) {
    %c0_i32 = arith.constant 0 : i32
    %c0_i32_0 = arith.constant 0 : i32
    %c0_i32_1 = arith.constant 0 : i32
    return %c0_i32, %c0_i32_0 : i32, i32
  }
  func.func @transform_6(%arg0: i32, %arg1: i32, %arg2: memref<2xi32, #tpu.memory_space<smem>>) -> (i32, i32) {
    %c0_i32 = arith.constant 0 : i32
    %c0_i32_0 = arith.constant 0 : i32
    %c0_i32_1 = arith.constant 0 : i32
    return %c0_i32, %c0_i32_0 : i32, i32
  }
  func.func @transform_7(%arg0: i32, %arg1: i32, %arg2: memref<2xi32, #tpu.memory_space<smem>>) -> (i32, i32) {
    %c0_i32 = arith.constant 0 : i32
    %c0_i32_0 = arith.constant 0 : i32
    %c0_i32_1 = arith.constant 0 : i32
    return %c0_i32, %c0_i32_0 : i32, i32
  }
  func.func @transform_8(%arg0: i32, %arg1: i32, %arg2: memref<2xi32, #tpu.memory_space<smem>>) -> (i32, i32) {
    %c0_i32 = arith.constant 0 : i32
    %c0_i32_0 = arith.constant 0 : i32
    %c0_i32_1 = arith.constant 0 : i32
    return %c0_i32, %c0_i32_0 : i32, i32
  }
  func.func @transform_9(%arg0: i32, %arg1: i32, %arg2: memref<2xi32, #tpu.memory_space<smem>>) -> i32 {
    %c0_i32 = arith.constant 0 : i32
    %c0_i32_0 = arith.constant 0 : i32
    return %c0_i32 : i32
  }
  func.func @transform_10(%arg0: i32, %arg1: i32, %arg2: memref<2xi32, #tpu.memory_space<smem>>) -> (i32, i32, i32) {
    %c0_i32 = arith.constant 0 : i32
    %c0_i32_0 = arith.constant 0 : i32
    return %arg0, %arg1, %c0_i32 : i32, i32, i32
  }
}

</mosaic_0001>

<llo_original>
// kernel: tpu_custom_call.1
$region0: #{tpu_custom_call.1}
  #allocation0 [shape = 'u32[]', space=smem, size = 0x4, offset = 0x4, fixed_abs, tag = 'smem constant byte address 0x4 - core index']
  #allocation1 [shape = 'u32[144,128]{1,0:T(1,128)}', space=vmem, size = 0x12000, scoped, tag = 'internal scratch']
  #allocation2 [shape = 'bf16[4,8,8]{2,1,0:T(8,128)(2,1)}', space=vmem, size = 0x2000, scoped, tag = 'scratch operand']
  #allocation3 [shape = 'bf16[4,8,8]{2,1,0:T(8,128)(2,1)}', space=vmem, size = 0x2000, scoped, tag = 'scratch operand']
  #allocation4 [shape = 'bf16[4,8,8]{2,1,0:T(8,128)(2,1)}', space=vmem, size = 0x2000, scoped, tag = 'scratch operand']
  #allocation5 [shape = 's32[1]{0}', space=sflag, size = 0x4, scoped, tag = 'scoped memory for tpu_custom_call.1']
  #allocation6 [shape = 'u8[512]{0}', space=smem, size = 0x200, scoped, tag = 'prefetched SMEM operand 0']
  %s0 = inlined_call_operand.hbm [shape: s32[2], index: 0, kind: input, shape index: {}]
  %s1 = inlined_call_operand.hbm [shape: f32[2,8,32], index: 1, kind: input, shape index: {}]
  %s2 = inlined_call_operand.hbm [shape: bf16[32,96], index: 2, kind: input, shape index: {}]
  %s3 = inlined_call_operand.hbm [shape: f32[1,96], index: 3, kind: input, shape index: {}]
  %s4 = inlined_call_operand.hbm [shape: bf16[32,32], index: 4, kind: input, shape index: {}]
  %s5 = inlined_call_operand.hbm [shape: f32[1,32], index: 5, kind: input, shape index: {}]
  %s6 = inlined_call_operand.hbm [shape: bf16[32,64], index: 6, kind: input, shape index: {}]
  %s7 = inlined_call_operand.hbm [shape: f32[1,64], index: 7, kind: input, shape index: {}]
  %s8 = inlined_call_operand.hbm [shape: bf16[64,32], index: 8, kind: input, shape index: {}]
  %s9 = inlined_call_operand.hbm [shape: f32[1,32], index: 9, kind: input, shape index: {}]
  %s10 = inlined_call_operand.hbm [shape: f32[4], index: 10, kind: input, shape index: {}]
  %s11 = inlined_call_operand.hbm [shape: f32[2,8,32], index: 11, kind: output, shape index: {}]
  %s12 = sld [smem:[#allocation0]]
  $region117: #{tpu_custom_call.1} parent=0
    _
  %s14 = ssub.s32 1, %s12
  %s15 = scalar_select 0, %s14, %s12
  %17 = dma.hbm_to_smem %s0, 16, [#allocation6], [#allocation5]
  %18 = dma.done [#allocation5], 16
  %19 = sfence
  $region1: #{tpu_custom_call.1} parent=0
    #allocation7 [shape = 'u8[8192]{0}', space=vmem, size = 0x2000, scoped, tag = 'input window, operand 1']
    #allocation8 [shape = 's32[2]{0}', space=sflag, size = 0x8, scoped, tag = 'scoped memory for tpu_custom_call.1']
    #allocation9 [shape = 's32[2]{0}', space=sflag, size = 0x8, scoped, tag = 'scoped memory for tpu_custom_call.1']
    #allocation10 [shape = 's32[2]{0}', space=sflag, size = 0x8, scoped, tag = 'scoped memory for tpu_custom_call.1']
    #allocation11 [shape = 'u8[8192]{0}', space=vmem, size = 0x2000, scoped, tag = 'input window, operand 2, single buffered']
    #allocation12 [shape = 's32[1]{0}', space=sflag, size = 0x4, scoped, tag = 'scoped memory for tpu_custom_call.1']
    #allocation13 [shape = 'u8[512]{0}', space=vmem, size = 0x400, scoped, tag = 'input window, operand 3, single buffered']
    #allocation14 [shape = 'u8[8192]{0}', space=vmem, size = 0x2000, scoped, tag = 'input window, operand 4, single buffered']
    #allocation15 [shape = 's32[1]{0}', space=sflag, size = 0x4, scoped, tag = 'scoped memory for tpu_custom_call.1']
    #allocation16 [shape = 'u8[512]{0}', space=vmem, size = 0x400, scoped, tag = 'input window, operand 5, single buffered']
    #allocation17 [shape = 'u8[8192]{0}', space=vmem, size = 0x2000, scoped, tag = 'input window, operand 6, single buffered']
    #allocation18 [shape = 's32[1]{0}', space=sflag, size = 0x4, scoped, tag = 'scoped memory for tpu_custom_call.1']
    #allocation19 [shape = 'u8[512]{0}', space=vmem, size = 0x400, scoped, tag = 'input window, operand 7, single buffered']
    #allocation20 [shape = 'u8[16384]{0}', space=vmem, size = 0x4000, scoped, tag = 'input window, operand 8, single buffered']
    #allocation21 [shape = 's32[1]{0}', space=sflag, size = 0x4, scoped, tag = 'scoped memory for tpu_custom_call.1']
    #allocation22 [shape = 'u8[512]{0}', space=vmem, size = 0x400, scoped, tag = 'input window, operand 9, single buffered']
    #allocation23 [shape = 'u8[512]{0}', space=smem, size = 0x200, scoped, tag = 'input window, operand 10, single buffered']
    #allocation24 [shape = 'u8[8192]{0}', space=vmem, size = 0x2000, scoped, tag = 'output window, operand 0']
    %20 = vsyncpa [#allocation8], 0
    %s21 = scalar_lea.sflag [#allocation8], 1
    %22 = vsyncpa %s21, 0
    %23 = vsyncpa [#allocation12], 0
    %24 = vsyncpa [#allocation15], 0
    %25 = vsyncpa [#allocation18], 0
    %26 = vsyncpa [#allocation21], 0
    %27 = vsyncpa [#allocation10], 0
    %28 = vsyncpa [#allocation9], 0
    %s29 = scalar_lea.sflag [#allocation9], 1
    %30 = vsyncpa %s29, 0
    loop: start=0, step=1, limit=4
    $region2: #{tpu_custom_call.1} parent=1 // loop_pre_header
      _
    $region3: #{tpu_custom_call.1} parent=1 // loop_header
      %s32 = sphi 0, %s36
      %p33 = scmp.ge.s32.totalorder %s32, 4
      %s39 = sphi 0, %s51
      %s40 = sphi 0, %s47
      %s41 = sphi 0, %s39
      %s42 = sphi 0, %s40
      %s43 = sphi 0, %s41
      %s44 = sphi 0, %s42
      %s54 = sphi 0, %s56
      %s57 = sphi 0, %s54
      %s58 = sphi 0, %s57
      %s74 = sphi 0, %s58
      %s78 = sphi 0, %s78
      %s80 = sphi 0, %s78
      %s81 = sphi 0, %s80
      %s95 = sphi 0, %s81
      %s99 = sphi 0, %s99
      %s101 = sphi 0, %s99
      %s102 = sphi 0, %s101
      %s116 = sphi 0, %s102
      %s120 = sphi 0, %s120
      %s122 = sphi 0, %s120
      %s123 = sphi 0, %s122
      %s137 = sphi 0, %s123
      %s141 = sphi 0, %s141
      %s143 = sphi 0, %s141
      %s144 = sphi 0, %s143
      %s158 = sphi 0, %s144
      %s162 = sphi 0, %s162
      %s164 = sphi 0, %s162
      %s165 = sphi 0, %s164
      %s179 = sphi 0, %s165
      %s183 = sphi 0, %s183
      %s185 = sphi 0, %s183
      %s186 = sphi 0, %s185
      %s200 = sphi 0, %s186
      %s204 = sphi 0, %s204
      %s206 = sphi 0, %s204
      %s207 = sphi 0, %s206
      %s221 = sphi 0, %s207
      %s225 = sphi 0, %s225
      %s227 = sphi 0, %s225
      %s228 = sphi 0, %s227
      %s242 = sphi 0, %s228
      %s246 = sphi 0, %s246
      %s248 = sphi 0, %s246
      %s249 = sphi 0, %s248
      %s263 = sphi 0, %s249
      %s271 = sphi 0, %s273
      %s274 = sphi 0, %s271
      %s275 = sphi 0, %s274
      %s291 = sphi 0, %s275
    $region4: #{tpu_custom_call.1} parent=1 // loop_header_branch
      %35 = sbr.rel (%p33) target = $region8
    $region5: #{tpu_custom_call.1} parent=1 // loop_body
      %s37 = ssub.s32 %s32, 1
      %s38 = ssub.s32 %s32, 2
      %s45 = sadd.s32 1, %s40
      %p46 = scmp.ge.s32.totalorder %s45, 1
      %s47 = scalar_select %p46, 0, %s45
      %s48 = sadd.s32 1, %s39
      %s49 = scalar_select %p46, %s48, %s39
      %p50 = scmp.ge.s32.totalorder %s49, 2
      %s51 = scalar_select %p50, 0, %s49
      %s52 = ssub.s32 %s39, %s51
      %p53 = scmp.eq.s32.totalorder %s52, 0
      %s55 = sadd.s32 %s54, 1
      %s56 = scalar_select %p53, %s54, %s55
      %p59 = pneg %p53
      %p60 = scmp.eq.s32.totalorder %s32, 1
      %p61 = por %p59, %p60
      %p62 = scmp.ne.s32.totalorder %s54, %s57
      %p63 = scmp.eq.s32.totalorder %s32, 0
      %p64 = por %p62, %p63
      %p65 = scmp.ne.s32.totalorder %s54, %s57
      %p66 = scmp.eq.s32.totalorder %s37, 1
      %p67 = por %p65, %p66
      %p68 = scmp.ne.s32.totalorder %s57, %s58
      %p69 = scmp.eq.s32.totalorder %s37, 0
      %p70 = por %p68, %p69
      %p71 = scmp.ne.s32.totalorder %s57, %s58
      %p72 = scmp.eq.s32.totalorder %s38, 1
      %p73 = por %p71, %p72
      %p75 = scmp.ne.s32.totalorder %s58, %s74
      %p76 = scmp.eq.s32.totalorder %s38, 0
      %p77 = por %p75, %p76
      %s79 = sadd.s32 %s78, 1
      %p82 = scmp.eq.s32.totalorder %s32, 1
      %p83 = scmp.ne.s32.totalorder %s78, %s80
      %p84 = scmp.eq.s32.totalorder %s32, 0
      %p85 = por %p83, %p84
      %p86 = scmp.ne.s32.totalorder %s78, %s80
      %p87 = scmp.eq.s32.totalorder %s37, 1
      %p88 = por %p86, %p87
      %p89 = scmp.ne.s32.totalorder %s80, %s81
      %p90 = scmp.eq.s32.totalorder %s37, 0
      %p91 = por %p89, %p90
      %p92 = scmp.ne.s32.totalorder %s80, %s81
      %p93 = scmp.eq.s32.totalorder %s38, 1
      %p94 = por %p92, %p93
      %p96 = scmp.ne.s32.totalorder %s81, %s95
      %p97 = scmp.eq.s32.totalorder %s38, 0
      %p98 = por %p96, %p97
      %s100 = sadd.s32 %s99, 1
      %p103 = scmp.eq.s32.totalorder %s32, 1
      %p104 = scmp.ne.s32.totalorder %s99, %s101
      %p105 = scmp.eq.s32.totalorder %s32, 0
      %p106 = por %p104, %p105
      %p107 = scmp.ne.s32.totalorder %s99, %s101
      %p108 = scmp.eq.s32.totalorder %s37, 1
      %p109 = por %p107, %p108
      %p110 = scmp.ne.s32.totalorder %s101, %s102
      %p111 = scmp.eq.s32.totalorder %s37, 0
      %p112 = por %p110, %p111
      %p113 = scmp.ne.s32.totalorder %s101, %s102
      %p114 = scmp.eq.s32.totalorder %s38, 1
      %p115 = por %p113, %p114
      %p117 = scmp.ne.s32.totalorder %s102, %s116
      %p118 = scmp.eq.s32.totalorder %s38, 0
      %p119 = por %p117, %p118
      %s121 = sadd.s32 %s120, 1
      %p124 = scmp.eq.s32.totalorder %s32, 1
      %p125 = scmp.ne.s32.totalorder %s120, %s122
      %p126 = scmp.eq.s32.totalorder %s32, 0
      %p127 = por %p125, %p126
      %p128 = scmp.ne.s32.totalorder %s120, %s122
      %p129 = scmp.eq.s32.totalorder %s37, 1
      %p130 = por %p128, %p129
      %p131 = scmp.ne.s32.totalorder %s122, %s123
      %p132 = scmp.eq.s32.totalorder %s37, 0
      %p133 = por %p131, %p132
      %p134 = scmp.ne.s32.totalorder %s122, %s123
      %p135 = scmp.eq.s32.totalorder %s38, 1
      %p136 = por %p134, %p135
      %p138 = scmp.ne.s32.totalorder %s123, %s137
      %p139 = scmp.eq.s32.totalorder %s38, 0
      %p140 = por %p138, %p139
      %s142 = sadd.s32 %s141, 1
      %p145 = scmp.eq.s32.totalorder %s32, 1
      %p146 = scmp.ne.s32.totalorder %s141, %s143
      %p147 = scmp.eq.s32.totalorder %s32, 0
      %p148 = por %p146, %p147
      %p149 = scmp.ne.s32.totalorder %s141, %s143
      %p150 = scmp.eq.s32.totalorder %s37, 1
      %p151 = por %p149, %p150
      %p152 = scmp.ne.s32.totalorder %s143, %s144
      %p153 = scmp.eq.s32.totalorder %s37, 0
      %p154 = por %p152, %p153
      %p155 = scmp.ne.s32.totalorder %s143, %s144
      %p156 = scmp.eq.s32.totalorder %s38, 1
      %p157 = por %p155, %p156
      %p159 = scmp.ne.s32.totalorder %s144, %s158
      %p160 = scmp.eq.s32.totalorder %s38, 0
      %p161 = por %p159, %p160
      %s163 = sadd.s32 %s162, 1
      %p166 = scmp.eq.s32.totalorder %s32, 1
      %p167 = scmp.ne.s32.totalorder %s162, %s164
      %p168 = scmp.eq.s32.totalorder %s32, 0
      %p169 = por %p167, %p168
      %p170 = scmp.ne.s32.totalorder %s162, %s164
      %p171 = scmp.eq.s32.totalorder %s37, 1
      %p172 = por %p170, %p171
      %p173 = scmp.ne.s32.totalorder %s164, %s165
      %p174 = scmp.eq.s32.totalorder %s37, 0
      %p175 = por %p173, %p174
      %p176 = scmp.ne.s32.totalorder %s164, %s165
      %p177 = scmp.eq.s32.totalorder %s38, 1
      %p178 = por %p176, %p177
      %p180 = scmp.ne.s32.totalorder %s165, %s179
      %p181 = scmp.eq.s32.totalorder %s38, 0
      %p182 = por %p180, %p181
      %s184 = sadd.s32 %s183, 1
      %p187 = scmp.eq.s32.totalorder %s32, 1
      %p188 = scmp.ne.s32.totalorder %s183, %s185
      %p189 = scmp.eq.s32.totalorder %s32, 0
      %p190 = por %p188, %p189
      %p191 = scmp.ne.s32.totalorder %s183, %s185
      %p192 = scmp.eq.s32.totalorder %s37, 1
      %p193 = por %p191, %p192
      %p194 = scmp.ne.s32.totalorder %s185, %s186
      %p195 = scmp.eq.s32.totalorder %s37, 0
      %p196 = por %p194, %p195
      %p197 = scmp.ne.s32.totalorder %s185, %s186
      %p198 = scmp.eq.s32.totalorder %s38, 1
      %p199 = por %p197, %p198
      %p201 = scmp.ne.s32.totalorder %s186, %s200
      %p202 = scmp.eq.s32.totalorder %s38, 0
      %p203 = por %p201, %p202
      %s205 = sadd.s32 %s204, 1
      %p208 = scmp.eq.s32.totalorder %s32, 1
      %p209 = scmp.ne.s32.totalorder %s204, %s206
      %p210 = scmp.eq.s32.totalorder %s32, 0
      %p211 = por %p209, %p210
      %p212 = scmp.ne.s32.totalorder %s204, %s206
      %p213 = scmp.eq.s32.totalorder %s37, 1
      %p214 = por %p212, %p213
      %p215 = scmp.ne.s32.totalorder %s206, %s207
      %p216 = scmp.eq.s32.totalorder %s37, 0
      %p217 = por %p215, %p216
      %p218 = scmp.ne.s32.totalorder %s206, %s207
      %p219 = scmp.eq.s32.totalorder %s38, 1
      %p220 = por %p218, %p219
      %p222 = scmp.ne.s32.totalorder %s207, %s221
      %p223 = scmp.eq.s32.totalorder %s38, 0
      %p224 = por %p222, %p223
      %s226 = sadd.s32 %s225, 1
      %p229 = scmp.eq.s32.totalorder %s32, 1
      %p230 = scmp.ne.s32.totalorder %s225, %s227
      %p231 = scmp.eq.s32.totalorder %s32, 0
      %p232 = por %p230, %p231
      %p233 = scmp.ne.s32.totalorder %s225, %s227
      %p234 = scmp.eq.s32.totalorder %s37, 1
      %p235 = por %p233, %p234
      %p236 = scmp.ne.s32.totalorder %s227, %s228
      %p237 = scmp.eq.s32.totalorder %s37, 0
      %p238 = por %p236, %p237
      %p239 = scmp.ne.s32.totalorder %s227, %s228
      %p240 = scmp.eq.s32.totalorder %s38, 1
      %p241 = por %p239, %p240
      %p243 = scmp.ne.s32.totalorder %s228, %s242
      %p244 = scmp.eq.s32.totalorder %s38, 0
      %p245 = por %p243, %p244
      %s247 = sadd.s32 %s246, 1
      %p250 = scmp.eq.s32.totalorder %s32, 1
      %p251 = scmp.ne.s32.totalorder %s246, %s248
      %p252 = scmp.eq.s32.totalorder %s32, 0
      %p253 = por %p251, %p252
      %p254 = scmp.ne.s32.totalorder %s246, %s248
      %p255 = scmp.eq.s32.totalorder %s37, 1
      %p256 = por %p254, %p255
      %p257 = scmp.ne.s32.totalorder %s248, %s249
      %p258 = scmp.eq.s32.totalorder %s37, 0
      %p259 = por %p257, %p258
      %p260 = scmp.ne.s32.totalorder %s248, %s249
      %p261 = scmp.eq.s32.totalorder %s38, 1
      %p262 = por %p260, %p261
      %p264 = scmp.ne.s32.totalorder %s249, %s263
      %p265 = scmp.eq.s32.totalorder %s38, 0
      %p266 = por %p264, %p265
      %s267 = ssub.s32 %s39, %s51
      %s268 = ssub.s32 %s40, %s47
      %s269 = sor.u32 %s267, %s268
      %p270 = scmp.eq.s32.totalorder %s269, 0
      %s272 = sadd.s32 %s271, 1
      %s273 = scalar_select %p270, %s271, %s272
      %p276 = pneg %p270
      %p277 = scmp.eq.s32.totalorder %s32, 1
      %p278 = por %p276, %p277
      %p279 = scmp.ne.s32.totalorder %s271, %s274
      %p280 = scmp.eq.s32.totalorder %s32, 0
      %p281 = por %p279, %p280
      %p282 = scmp.ne.s32.totalorder %s271, %s274
      %p283 = scmp.eq.s32.totalorder %s37, 1
      %p284 = por %p282, %p283
      %p285 = scmp.ne.s32.totalorder %s274, %s275
      %p286 = scmp.eq.s32.totalorder %s37, 0
      %p287 = por %p285, %p286
      %p288 = scmp.ne.s32.totalorder %s274, %s275
      %p289 = scmp.eq.s32.totalorder %s38, 1
      %p290 = por %p288, %p289
      %p292 = scmp.ne.s32.totalorder %s275, %s291
      %p293 = scmp.eq.s32.totalorder %s38, 0
      %p294 = por %p292, %p293
      %p295 = scmp.le.s32.totalorder 1, %s32
      %p296 = scmp.lt.s32.totalorder %s32, 3
      %p297 = pnand %p295, %p296
      %p298 = pneg %p297
      // Predicated region
      $region9: #{tpu_custom_call.1} parent=5 // pred_check
        _
      $region10: #{tpu_custom_call.1} parent=5 // pred_check_branch
        %300 = sbr.rel (%p297) target = $region12
      $region11: #{tpu_custom_call.1} parent=5 // pred_region
        %s301 = ssub.s32 %s32, 1
        // Predicated region
        $region13: #{tpu_custom_call.1} parent=11 // pred_check
          %p302 = pneg %p91
        $region14: #{tpu_custom_call.1} parent=11 // pred_check_branch
          %304 = sbr.rel (%p302) target = $region16
        $region15: #{tpu_custom_call.1} parent=11 // pred_region
          %s306 = ssub.s32 256, 256
          %307 = vsyncadd [#allocation12], %s306
          %s308 = sshll.u32 [#allocation11], 4
          %s309 = int_to_ptr.vmem [resolvable:$true] %s308
          %314 = dma.hbm_to_vmem [thread:$0]  %s2, 256, %s309, [#allocation12], 64, 64, 4
        $region16: #{tpu_custom_call.1} parent=11 // pred_fallthru
          _
        // Predicated region
        $region17: #{tpu_custom_call.1} parent=11 // pred_check
          %p315 = pneg %p112
        $region18: #{tpu_custom_call.1} parent=11 // pred_check_branch
          %317 = sbr.rel (%p315) target = $region20
        $region19: #{tpu_custom_call.1} parent=11 // pred_region
          %s319 = ssub.s32 16, 16
          %320 = vsyncadd [#allocation12], %s319
          %s322 = sshll.u32 [#allocation13], 4
          %s323 = int_to_ptr.vmem [resolvable:$true] %s322
          %325 = dma.hbm_to_vmem [thread:$0]  %s3, 16, %s323, [#allocation12]
        $region20: #{tpu_custom_call.1} parent=11 // pred_fallthru
          _
        // Predicated region
        $region21: #{tpu_custom_call.1} parent=11 // pred_check
          %p326 = pneg %p133
        $region22: #{tpu_custom_call.1} parent=11 // pred_check_branch
          %328 = sbr.rel (%p326) target = $region24
        $region23: #{tpu_custom_call.1} parent=11 // pred_region
          %s330 = ssub.s32 256, 256
          %331 = vsyncadd [#allocation15], %s330
          %s332 = sshll.u32 [#allocation14], 4
          %s333 = int_to_ptr.vmem [resolvable:$true] %s332
          %338 = dma.hbm_to_vmem [thread:$0]  %s4, 256, %s333, [#allocation15], 64, 64, 4
        $region24: #{tpu_custom_call.1} parent=11 // pred_fallthru
          _
        // Predicated region
        $region25: #{tpu_custom_call.1} parent=11 // pred_check
          %p339 = pneg %p154
        $region26: #{tpu_custom_call.1} parent=11 // pred_check_branch
          %341 = sbr.rel (%p339) target = $region28
        $region27: #{tpu_custom_call.1} parent=11 // pred_region
          %s343 = ssub.s32 16, 16
          %344 = vsyncadd [#allocation15], %s343
          %s346 = sshll.u32 [#allocation16], 4
          %s347 = int_to_ptr.vmem [resolvable:$true] %s346
          %349 = dma.hbm_to_vmem [thread:$0]  %s5, 16, %s347, [#allocation15]
        $region28: #{tpu_custom_call.1} parent=11 // pred_fallthru
          _
        // Predicated region
        $region29: #{tpu_custom_call.1} parent=11 // pred_check
          %p350 = pneg %p175
        $region30: #{tpu_custom_call.1} parent=11 // pred_check_branch
          %352 = sbr.rel (%p350) target = $region32
        $region31: #{tpu_custom_call.1} parent=11 // pred_region
          %s354 = ssub.s32 256, 256
          %355 = vsyncadd [#allocation18], %s354
          %s356 = sshll.u32 [#allocation17], 4
          %s357 = int_to_ptr.vmem [resolvable:$true] %s356
          %362 = dma.hbm_to_vmem [thread:$0]  %s6, 256, %s357, [#allocation18], 64, 64, 4
        $region32: #{tpu_custom_call.1} parent=11 // pred_fallthru
          _
        // Predicated region
        $region33: #{tpu_custom_call.1} parent=11 // pred_check
          %p363 = pneg %p196
        $region34: #{tpu_custom_call.1} parent=11 // pred_check_branch
          %365 = sbr.rel (%p363) target = $region36
        $region35: #{tpu_custom_call.1} parent=11 // pred_region
          %s367 = ssub.s32 16, 16
          %368 = vsyncadd [#allocation18], %s367
          %s370 = sshll.u32 [#allocation19], 4
          %s371 = int_to_ptr.vmem [resolvable:$true] %s370
          %373 = dma.hbm_to_vmem [thread:$0]  %s7, 16, %s371, [#allocation18]
        $region36: #{tpu_custom_call.1} parent=11 // pred_fallthru
          _
        // Predicated region
        $region37: #{tpu_custom_call.1} parent=11 // pred_check
          %p374 = pneg %p217
        $region38: #{tpu_custom_call.1} parent=11 // pred_check_branch
          %376 = sbr.rel (%p374) target = $region40
        $region39: #{tpu_custom_call.1} parent=11 // pred_region
          %s378 = ssub.s32 512, 512
          %379 = vsyncadd [#allocation21], %s378
          %s380 = sshll.u32 [#allocation20], 4
          %s381 = int_to_ptr.vmem [resolvable:$true] %s380
          %386 = dma.hbm_to_vmem [thread:$0]  %s8, 512, %s381, [#allocation21], 64, 64, 4
        $region40: #{tpu_custom_call.1} parent=11 // pred_fallthru
          _
        // Predicated region
        $region41: #{tpu_custom_call.1} parent=11 // pred_check
          %p387 = pneg %p238
        $region42: #{tpu_custom_call.1} parent=11 // pred_check_branch
          %389 = sbr.rel (%p387) target = $region44
        $region43: #{tpu_custom_call.1} parent=11 // pred_region
          %s391 = ssub.s32 16, 16
          %392 = vsyncadd [#allocation21], %s391
          %s394 = sshll.u32 [#allocation22], 4
          %s395 = int_to_ptr.vmem [resolvable:$true] %s394
          %397 = dma.hbm_to_vmem [thread:$0]  %s9, 16, %s395, [#allocation21]
        $region44: #{tpu_custom_call.1} parent=11 // pred_fallthru
          _
        // Predicated region
        $region45: #{tpu_custom_call.1} parent=11 // pred_check
          %p398 = pneg %p259
        $region46: #{tpu_custom_call.1} parent=11 // pred_check_branch
          %400 = sbr.rel (%p398) target = $region48
        $region47: #{tpu_custom_call.1} parent=11 // pred_region
          %s402 = ssub.s32 16, 16
          %403 = vsyncadd [#allocation10], %s402
          %406 = dma.hbm_to_smem %s10, 16, [#allocation23], [#allocation10]
        $region48: #{tpu_custom_call.1} parent=11 // pred_fallthru
          _
      $region12: #{tpu_custom_call.1} parent=5 // pred_fallthru
        _
      %p407 = scmp.lt.s32.totalorder %s32, 2
      // Predicated region
      $region49: #{tpu_custom_call.1} parent=5 // pred_check
        %p408 = pneg %p407
      $region50: #{tpu_custom_call.1} parent=5 // pred_check_branch
        %410 = sbr.rel (%p408) target = $region52
      $region51: #{tpu_custom_call.1} parent=5 // pred_region
        // Predicated region
        $region53: #{tpu_custom_call.1} parent=51 // pred_check
          %p411 = pneg %p64
        $region54: #{tpu_custom_call.1} parent=51 // pred_check_branch
          %413 = sbr.rel (%p411) target = $region56
        $region55: #{tpu_custom_call.1} parent=51 // pred_region
          %s414 = sand.u32 %s54, 1
          %s415 = scalar_lea.sflag [#allocation8], %s414
          %s416 = sand.u32 %s54, 1
          %s417 = smul.addr %s416, 8
          %s418 = scalar_lea.vmem [#allocation7], %s417
          %s420 = ssub.s32 128, 128
          %421 = vsyncadd %s415, %s420
          %s422 = smul.addr %s39, 128
          %s423 = scalar_lea.hbm %s1, %s422
          %s425 = sshll.u32 %s418, 4
          %s426 = int_to_ptr.vmem [resolvable:$true] %s425
          %428 = dma.hbm_to_vmem [thread:$0]  %s423, 128, %s426, %s415
        $region56: #{tpu_custom_call.1} parent=51 // pred_fallthru
          _
      $region52: #{tpu_custom_call.1} parent=5 // pred_fallthru
        _
      %p429 = scmp.le.s32.totalorder 1, %s32
      %p430 = scmp.lt.s32.totalorder %s32, 3
      %p431 = pnand %p429, %p430
      %p432 = pneg %p431
      // Predicated region
      $region57: #{tpu_custom_call.1} parent=5 // pred_check
        _
      $region58: #{tpu_custom_call.1} parent=5 // pred_check_branch
        %434 = sbr.rel (%p431) target = $region60
      $region59: #{tpu_custom_call.1} parent=5 // pred_region
        %s435 = ssub.s32 %s32, 1
        %s436 = sand.u32 %s57, 1
        %s437 = scalar_lea.sflag [#allocation8], %s436
        %s438 = sand.u32 %s57, 1
        %s439 = smul.addr %s438, 8
        %s440 = scalar_lea.vmem [#allocation7], %s439
        // Predicated region
        $region61: #{tpu_custom_call.1} parent=59 // pred_check
          %p441 = pneg %p70
        $region62: #{tpu_custom_call.1} parent=59 // pred_check_branch
          %443 = sbr.rel (%p441) target = $region64
        $region63: #{tpu_custom_call.1} parent=59 // pred_region
          %444 = dma.done %s437, 128
        $region64: #{tpu_custom_call.1} parent=59 // pred_fallthru
          _
        // Predicated region
        $region65: #{tpu_custom_call.1} parent=59 // pred_check
          %p445 = pneg %p91
        $region66: #{tpu_custom_call.1} parent=59 // pred_check_branch
          %447 = sbr.rel (%p445) target = $region68
        $region67: #{tpu_custom_call.1} parent=59 // pred_region
          %448 = dma.done [#allocation12], 256
        $region68: #{tpu_custom_call.1} parent=59 // pred_fallthru
          _
        // Predicated region
        $region69: #{tpu_custom_call.1} parent=59 // pred_check
          %p449 = pneg %p112
        $region70: #{tpu_custom_call.1} parent=59 // pred_check_branch
          %451 = sbr.rel (%p449) target = $region72
        $region71: #{tpu_custom_call.1} parent=59 // pred_region
          %452 = dma.done [#allocation12], 16
        $region72: #{tpu_custom_call.1} parent=59 // pred_fallthru
          _
        // Predicated region
        $region73: #{tpu_custom_call.1} parent=59 // pred_check
          %p453 = pneg %p133
        $region74: #{tpu_custom_call.1} parent=59 // pred_check_branch
          %455 = sbr.rel (%p453) target = $region76
        $region75: #{tpu_custom_call.1} parent=59 // pred_region
          %456 = dma.done [#allocation15], 256
        $region76: #{tpu_custom_call.1} parent=59 // pred_fallthru
          _
        // Predicated region
        $region77: #{tpu_custom_call.1} parent=59 // pred_check
          %p457 = pneg %p154
        $region78: #{tpu_custom_call.1} parent=59 // pred_check_branch
          %459 = sbr.rel (%p457) target = $region80
        $region79: #{tpu_custom_call.1} parent=59 // pred_region
          %460 = dma.done [#allocation15], 16
        $region80: #{tpu_custom_call.1} parent=59 // pred_fallthru
          _
        // Predicated region
        $region81: #{tpu_custom_call.1} parent=59 // pred_check
          %p461 = pneg %p175
        $region82: #{tpu_custom_call.1} parent=59 // pred_check_branch
          %463 = sbr.rel (%p461) target = $region84
        $region83: #{tpu_custom_call.1} parent=59 // pred_region
          %464 = dma.done [#allocation18], 256
        $region84: #{tpu_custom_call.1} parent=59 // pred_fallthru
          _
        // Predicated region
        $region85: #{tpu_custom_call.1} parent=59 // pred_check
          %p465 = pneg %p196
        $region86: #{tpu_custom_call.1} parent=59 // pred_check_branch
          %467 = sbr.rel (%p465) target = $region88
        $region87: #{tpu_custom_call.1} parent=59 // pred_region
          %468 = dma.done [#allocation18], 16
        $region88: #{tpu_custom_call.1} parent=59 // pred_fallthru
          _
        // Predicated region
        $region89: #{tpu_custom_call.1} parent=59 // pred_check
          %p469 = pneg %p217
        $region90: #{tpu_custom_call.1} parent=59 // pred_check_branch
          %471 = sbr.rel (%p469) target = $region92
        $region91: #{tpu_custom_call.1} parent=59 // pred_region
          %472 = dma.done [#allocation21], 512
        $region92: #{tpu_custom_call.1} parent=59 // pred_fallthru
          _
        // Predicated region
        $region93: #{tpu_custom_call.1} parent=59 // pred_check
          %p473 = pneg %p238
        $region94: #{tpu_custom_call.1} parent=59 // pred_check_branch
          %475 = sbr.rel (%p473) target = $region96
        $region95: #{tpu_custom_call.1} parent=59 // pred_region
          %476 = dma.done [#allocation21], 16
        $region96: #{tpu_custom_call.1} parent=59 // pred_fallthru
          _
        // Predicated region
        $region97: #{tpu_custom_call.1} parent=59 // pred_check
          %p477 = pneg %p259
        $region98: #{tpu_custom_call.1} parent=59 // pred_check_branch
          %479 = sbr.rel (%p477) target = $region100
        $region99: #{tpu_custom_call.1} parent=59 // pred_region
          %480 = dma.done [#allocation10], 16
        $region100: #{tpu_custom_call.1} parent=59 // pred_fallthru
          _
        %481 = sfence
        %s482 = sand.u32 %s57, 1
        %s483 = scalar_lea.sflag [#allocation8], %s482
        %s484 = sand.u32 %s57, 1
        %s485 = smul.addr %s484, 8
        %s486 = scalar_lea.vmem [#allocation7], %s485
        %p487 = pneg %p70
        %p488 = pneg %p67
        %p489 = pneg %p91
        %p490 = pneg %p88
        %p491 = pneg %p112
        %p492 = pneg %p109
        %p493 = pneg %p133
        %p494 = pneg %p130
        %p495 = pneg %p154
        %p496 = pneg %p151
        %p497 = pneg %p175
        %p498 = pneg %p172
        %p499 = pneg %p196
        %p500 = pneg %p193
        %p501 = pneg %p217
        %p502 = pneg %p214
        %p503 = pneg %p238
        %p504 = pneg %p235
        %p505 = pneg %p259
        %p506 = pneg %p256
        %p507 = pneg %p287
        %p508 = pneg %p284
        %s509 = sand.u32 %s274, 1
        %s510 = scalar_lea.sflag [#allocation9], %s509
        %s511 = sand.u32 %s274, 1
        %s512 = smul.addr %s511, 8
        %s513 = scalar_lea.vmem [#allocation24], %s512
        %s515 = sld [smem:[#allocation23]]
        %s516 = sld [smem:[#allocation23 + $0x1]]
        %s517 = sld [smem:[#allocation23 + $0x2]]
        %s518 = sld [smem:[#allocation23 + $0x3]]
        %s519 = sld [smem:[#allocation6 + %s41]]
        %p520 = scmp.eq.s32.totalorder %s42, 0
        // Predicated region
        $region101: #{tpu_custom_call.1} parent=59 // pred_check
          %p521 = pneg %p520
        $region102: #{tpu_custom_call.1} parent=59 // pred_check_branch
          %523 = sbr.rel (%p521) target = $region104
        $region103: #{tpu_custom_call.1} parent=59 // pred_region
          %v524 = vld [vmem:[%s440] sm:$0xff]
          %vm525 = vcmask 261120
          %v526 = vsel %vm525, %v524, 0.0
          %527 = vadd.xlane.f32.xlu0 %v526
          %v528 = vpop.xlane.xlu0 %527
          %v529 = vrcp.pop 32.0
          %v530 = vmul.f32 %v528, %v529
          %v531 = vsub.f32 %v524, %v530
          %v532 = vmul.f32 %v531, %v531
          %v533 = vsel %vm525, %v532, 0.0
          %534 = vadd.xlane.f32.xlu0 %v533
          %v535 = vpop.xlane.xlu0 %534
          %v536 = vmul.f32 %v535, 0.032258064
          %v537 = vrsqrt.pop %v536
          %v538 = vmul.f32 %v536, %v537
          %vm539 = vcmp.eq.f32.partialorder %v536, inf
          %v540 = vsel %vm539, %v536, %v538
          %vm541 = vcmp.eq.f32.partialorder %v536, 0.0
          %v542 = vand.u32 %v536, 2147483648
          %v543 = vsel %vm541, %v542, %v540
          %v544 = vadd.f32 %v543, 1e-06
          %v545 = vrcp.pop %v544
          %v546 = vstv %s515
          %v547 = vmul.f32 %v546, %v531
          %v548 = vmul.f32 %v547, %v545
          %v549 = vstv %s516
          %v550 = vadd.f32 %v548, %v549
          %v551 = vpack.c.bf16 %v550, %v550
          %v552 = vld [vmem:[#allocation11] sm:$0xf]
          %v553 = vld [vmem:[#allocation11 + $0x4] sm:$0xf]
          %v554 = vld [vmem:[#allocation11 + $0x8] sm:$0xf]
          %v555 = vld [vmem:[#allocation11 + $0xc] sm:$0xf]
          %v556 = vld [vmem:[#allocation13] sm:$0x1]
          %v558 = vlaneseq
          %v559 = vshrl.u32 %v558, 7
          %v560 = vsub.s32 0, %v559
          %v561 = vrot.slane %v556, %v560
          %v567 = vunpack.c.l.b16 %v552
          %v568 = vunpack.c.l.b16 %v553
          %v569 = vunpack.c.l.b16 %v554
          %v570 = vunpack.c.l.b16 %v555
          %v571 = vpack.c.b16 %v568, %v567
          %v572 = vpack.c.b16 %v570, %v569
          %v576 = vsel %vm525, %v551, 0
          %578 = vmatprep.subr.bf16.mxu0 0
          %579 = vmatpush1.bf16.msra.mxu0 %v571
          %580 = vmatprep.subr.bf16.mxu0 0
          %581 = vmatpush1.bf16.msra.mxu0 %v572
          %582 = vmatprep.subr.bf16.mxu0 0
          %583 = vmatpush1.bf16.msra.mxu0 0
          %584 = vmatprep.subr.bf16.mxu0 0
          %585 = vmatpush1.bf16.msra.mxu0 0
          %586 = vmatprep.subr.bf16.mxu0 0
          %587 = vmatpush1.bf16.msra.mxu0 0
          %588 = vmatprep.subr.bf16.mxu0 0
          %589 = vmatpush1.bf16.msra.mxu0 0
          %590 = vmatprep.subr.bf16.mxu0 0
          %591 = vmatpush1.bf16.msra.mxu0 0
          %592 = vmatprep.subr.bf16.mxu0 0
          %593 = vmatpush1.bf16.msra.mxu0 0
          %594 = vmatprep.subr.bf16.mxu0 0
          %595 = vmatpush1.bf16.msra.mxu0 0
          %596 = vmatprep.subr.bf16.mxu0 0
          %597 = vmatpush1.bf16.msra.mxu0 0
          %598 = vmatprep.subr.bf16.mxu0 0
          %599 = vmatpush1.bf16.msra.mxu0 0
          %600 = vmatprep.subr.bf16.mxu0 0
          %601 = vmatpush1.bf16.msra.mxu0 0
          %602 = vmatprep.subr.bf16.mxu0 0
          %603 = vmatpush1.bf16.msra.mxu0 0
          %604 = vmatprep.subr.bf16.mxu0 0
          %605 = vmatpush1.bf16.msra.mxu0 0
          %606 = vmatprep.subr.bf16.mxu0 0
          %607 = vmatpush1.bf16.msra.mxu0 0
          %608 = vmatprep.subr.bf16.mxu0 0
          %609 = vmatpush1.bf16.msra.mxu0 0
          %610 = vmatprep.mubr.bf16.mxu0 0
          %611 = vmatmul.mubr.bf16.gmra.mrb[0].mxu0 %v576
          %v612 = vpop.f32.mrb[0].mxu0
          %v613 = vadd.f32 %v561, %v612
          %v614 = vpop.f32.mrb[0].mxu0
          %v615 = vpop.f32.mrb[0].mxu0
          %v616 = vpop.f32.mrb[0].mxu0
          %617 = vdwg.mxu0
          %619 = vrot.lane.b32.xlu0 %v613, 120
          %v620 = vpop.permute.xlu0 %619
          %622 = vrot.lane.b32.xlu0 %v613, 112
          %v623 = vpop.permute.xlu0 %622
          %625 = vrot.lane.b32.xlu0 %v613, 104
          %v626 = vpop.permute.xlu0 %625
          %v628 = vcombine.low %v613, %v623
          %v629 = vcombine.high %v613, %v623
          %v631 = vunpack.c.l.s4 1983009808
          %v632 = vunpack.c.0.s8 %v631
          %v633 = vlaneseq
          %v634 = vshrl.u32 %v633, 7
          %v635 = vsub.s32 %v632, %v634
          %v636 = vrot.slane %v628, %v635
          %v638 = vunpack.c.l.s4 1983009808
          %v639 = vunpack.c.0.s8 %v638
          %v640 = vlaneseq
          %v641 = vshrl.u32 %v640, 7
          %v642 = vsub.s32 %v639, %v641
          %v643 = vrot.slane %v629, %v642
          %v644 = vcombine.low %v620, %v626
          %v645 = vcombine.high %v620, %v626
          %v647 = vunpack.c.l.s4 1983009808
          %v648 = vunpack.c.0.s8 %v647
          %v649 = vlaneseq
          %v650 = vshrl.u32 %v649, 7
          %v651 = vsub.s32 %v648, %v650
          %v652 = vrot.slane %v644, %v651
          %v654 = vunpack.c.l.s4 1983009808
          %v655 = vunpack.c.0.s8 %v654
          %v656 = vlaneseq
          %v657 = vshrl.u32 %v656, 7
          %v658 = vsub.s32 %v655, %v657
          %v659 = vrot.slane %v645, %v658
          %v660 = vcombine.low %v636, %v652
          %v661 = vcombine.high %v636, %v652
          %v663 = vunpack.c.l.s4 1934713408
          %v664 = vunpack.c.0.s8 %v663
          %v665 = vlaneseq
          %v666 = vshrl.u32 %v665, 7
          %v667 = vsub.s32 %v664, %v666
          %v668 = vrot.slane %v660, %v667
          %v670 = vunpack.c.l.s4 1934713408
          %v671 = vunpack.c.0.s8 %v670
          %v672 = vlaneseq
          %v673 = vshrl.u32 %v672, 7
          %v674 = vsub.s32 %v671, %v673
          %v675 = vrot.slane %v661, %v674
          %v676 = vcombine.low %v643, %v659
          %v677 = vcombine.high %v643, %v659
          %v679 = vunpack.c.l.s4 1934713408
          %v680 = vunpack.c.0.s8 %v679
          %v681 = vlaneseq
          %v682 = vshrl.u32 %v681, 7
          %v683 = vsub.s32 %v680, %v682
          %v684 = vrot.slane %v676, %v683
          %v686 = vunpack.c.l.s4 1934713408
          %v687 = vunpack.c.0.s8 %v686
          %v688 = vlaneseq
          %v689 = vshrl.u32 %v688, 7
          %v690 = vsub.s32 %v687, %v689
          %v691 = vrot.slane %v677, %v690
          %v692 = vcombine.high %v668, 0.0
          %v693 = vcombine.high %v675, 0.0
          %v694 = vcombine.high %v684, 0.0
          %v695 = vcombine.high %v691, 0.0
          %v696 = vcombine.low %v668, %v675
          %v698 = vunpack.c.l.s4 1983009808
          %v699 = vunpack.c.0.s8 %v698
          %v700 = vlaneseq
          %v701 = vshrl.u32 %v700, 7
          %v702 = vsub.s32 %v699, %v701
          %v703 = vrot.slane %v696, %v702
          %v704 = vcombine.low %v692, %v693
          %v706 = vunpack.c.l.s4 1983009808
          %v707 = vunpack.c.0.s8 %v706
          %v708 = vlaneseq
          %v709 = vshrl.u32 %v708, 7
          %v710 = vsub.s32 %v707, %v709
          %v711 = vrot.slane %v704, %v710
          %v712 = vcombine.low %v684, %v691
          %v714 = vunpack.c.l.s4 1983009808
          %v715 = vunpack.c.0.s8 %v714
          %v716 = vlaneseq
          %v717 = vshrl.u32 %v716, 7
          %v718 = vsub.s32 %v715, %v717
          %v719 = vrot.slane %v712, %v718
          %v720 = vcombine.low %v694, %v695
          %v722 = vunpack.c.l.s4 1983009808
          %v723 = vunpack.c.0.s8 %v722
          %v724 = vlaneseq
          %v725 = vshrl.u32 %v724, 7
          %v726 = vsub.s32 %v723, %v725
          %v727 = vrot.slane %v720, %v726
          %v728 = vcombine.low %v703, %v711
          %v729 = vcombine.high %v703, %v711
          %v731 = vunpack.c.l.s4 1934713408
          %v732 = vunpack.c.0.s8 %v731
          %v733 = vlaneseq
          %v734 = vshrl.u32 %v733, 7
          %v735 = vsub.s32 %v732, %v734
          %v736 = vrot.slane %v728, %v735
          %v738 = vunpack.c.l.s4 1934713408
          %v739 = vunpack.c.0.s8 %v738
          %v740 = vlaneseq
          %v741 = vshrl.u32 %v740, 7
          %v742 = vsub.s32 %v739, %v741
          %v743 = vrot.slane %v729, %v742
          %v744 = vcombine.low %v719, %v727
          %v745 = vcombine.high %v719, %v727
          %v747 = vunpack.c.l.s4 1934713408
          %v748 = vunpack.c.0.s8 %v747
          %v749 = vlaneseq
          %v750 = vshrl.u32 %v749, 7
          %v751 = vsub.s32 %v748, %v750
          %v752 = vrot.slane %v744, %v751
          %v754 = vunpack.c.l.s4 1934713408
          %v755 = vunpack.c.0.s8 %v754
          %v756 = vlaneseq
          %v757 = vshrl.u32 %v756, 7
          %v758 = vsub.s32 %v755, %v757
          %v759 = vrot.slane %v745, %v758
          %v760 = vcombine.low %v736, %v752
          %v761 = vcombine.high %v736, %v752
          %v762 = vcombine.low %v743, %v759
          %v763 = vcombine.high %v743, %v759
          %v764 = vpack.c.bf16 %v760, %v760
          %v765 = vpack.c.bf16 %v761, %v761
          %v766 = vpack.c.bf16 %v762, %v762
          %v767 = vpack.c.bf16 %v763, %v763
          %vm768 = vcmask 60416
          %769 = vst.msk [vmem:[#allocation2] sm:$0xf] %vm768, %v764
          %770 = vst.msk [vmem:[#allocation2 + $0x4] sm:$0xf] %vm768, %v765
          %771 = vst.msk [vmem:[#allocation2 + $0x8] sm:$0xf] %vm768, %v766
          %772 = vst.msk [vmem:[#allocation2 + $0xc] sm:$0xf] %vm768, %v767
          %773 = vrot.lane.b32.xlu0 %v613, 96
          %v774 = vpop.permute.xlu0 %773
          %775 = vrot.lane.b32.xlu0 %v620, 96
          %v776 = vpop.permute.xlu0 %775
          %777 = vrot.lane.b32.xlu0 %v623, 96
          %v778 = vpop.permute.xlu0 %777
          %779 = vrot.lane.b32.xlu0 %v626, 96
          %v780 = vpop.permute.xlu0 %779
          %v785 = vcombine.low %v774, %v778
          %v786 = vcombine.high %v774, %v778
          %v788 = vunpack.c.l.s4 1983009808
          %v789 = vunpack.c.0.s8 %v788
          %v790 = vlaneseq
          %v791 = vshrl.u32 %v790, 7
          %v792 = vsub.s32 %v789, %v791
          %v793 = vrot.slane %v785, %v792
          %v795 = vunpack.c.l.s4 1983009808
          %v796 = vunpack.c.0.s8 %v795
          %v797 = vlaneseq
          %v798 = vshrl.u32 %v797, 7
          %v799 = vsub.s32 %v796, %v798
          %v800 = vrot.slane %v786, %v799
          %v801 = vcombine.low %v776, %v780
          %v802 = vcombine.high %v776, %v780
          %v804 = vunpack.c.l.s4 1983009808
          %v805 = vunpack.c.0.s8 %v804
          %v806 = vlaneseq
          %v807 = vshrl.u32 %v806, 7
          %v808 = vsub.s32 %v805, %v807
          %v809 = vrot.slane %v801, %v808
          %v811 = vunpack.c.l.s4 1983009808
          %v812 = vunpack.c.0.s8 %v811
          %v813 = vlaneseq
          %v814 = vshrl.u32 %v813, 7
          %v815 = vsub.s32 %v812, %v814
          %v816 = vrot.slane %v802, %v815
          %v817 = vcombine.low %v793, %v809
          %v818 = vcombine.high %v793, %v809
          %v820 = vunpack.c.l.s4 1934713408
          %v821 = vunpack.c.0.s8 %v820
          %v822 = vlaneseq
          %v823 = vshrl.u32 %v822, 7
          %v824 = vsub.s32 %v821, %v823
          %v825 = vrot.slane %v817, %v824
          %v827 = vunpack.c.l.s4 1934713408
          %v828 = vunpack.c.0.s8 %v827
          %v829 = vlaneseq
          %v830 = vshrl.u32 %v829, 7
          %v831 = vsub.s32 %v828, %v830
          %v832 = vrot.slane %v818, %v831
          %v833 = vcombine.low %v800, %v816
          %v834 = vcombine.high %v800, %v816
          %v836 = vunpack.c.l.s4 1934713408
          %v837 = vunpack.c.0.s8 %v836
          %v838 = vlaneseq
          %v839 = vshrl.u32 %v838, 7
          %v840 = vsub.s32 %v837, %v839
          %v841 = vrot.slane %v833, %v840
          %v843 = vunpack.c.l.s4 1934713408
          %v844 = vunpack.c.0.s8 %v843
          %v845 = vlaneseq
          %v846 = vshrl.u32 %v845, 7
          %v847 = vsub.s32 %v844, %v846
          %v848 = vrot.slane %v834, %v847
          %v849 = vcombine.high %v825, 0.0
          %v850 = vcombine.high %v832, 0.0
          %v851 = vcombine.high %v841, 0.0
          %v852 = vcombine.high %v848, 0.0
          %v853 = vcombine.low %v825, %v832
          %v855 = vunpack.c.l.s4 1983009808
          %v856 = vunpack.c.0.s8 %v855
          %v857 = vlaneseq
          %v858 = vshrl.u32 %v857, 7
          %v859 = vsub.s32 %v856, %v858
          %v860 = vrot.slane %v853, %v859
          %v861 = vcombine.low %v849, %v850
          %v863 = vunpack.c.l.s4 1983009808
          %v864 = vunpack.c.0.s8 %v863
          %v865 = vlaneseq
          %v866 = vshrl.u32 %v865, 7
          %v867 = vsub.s32 %v864, %v866
          %v868 = vrot.slane %v861, %v867
          %v869 = vcombine.low %v841, %v848
          %v871 = vunpack.c.l.s4 1983009808
          %v872 = vunpack.c.0.s8 %v871
          %v873 = vlaneseq
          %v874 = vshrl.u32 %v873, 7
          %v875 = vsub.s32 %v872, %v874
          %v876 = vrot.slane %v869, %v875
          %v877 = vcombine.low %v851, %v852
          %v879 = vunpack.c.l.s4 1983009808
          %v880 = vunpack.c.0.s8 %v879
          %v881 = vlaneseq
          %v882 = vshrl.u32 %v881, 7
          %v883 = vsub.s32 %v880, %v882
          %v884 = vrot.slane %v877, %v883
          %v885 = vcombine.low %v860, %v868
          %v886 = vcombine.high %v860, %v868
          %v888 = vunpack.c.l.s4 1934713408
          %v889 = vunpack.c.0.s8 %v888
          %v890 = vlaneseq
          %v891 = vshrl.u32 %v890, 7
          %v892 = vsub.s32 %v889, %v891
          %v893 = vrot.slane %v885, %v892
          %v895 = vunpack.c.l.s4 1934713408
          %v896 = vunpack.c.0.s8 %v895
          %v897 = vlaneseq
          %v898 = vshrl.u32 %v897, 7
          %v899 = vsub.s32 %v896, %v898
          %v900 = vrot.slane %v886, %v899
          %v901 = vcombine.low %v876, %v884
          %v902 = vcombine.high %v876, %v884
          %v904 = vunpack.c.l.s4 1934713408
          %v905 = vunpack.c.0.s8 %v904
          %v906 = vlaneseq
          %v907 = vshrl.u32 %v906, 7
          %v908 = vsub.s32 %v905, %v907
          %v909 = vrot.slane %v901, %v908
          %v911 = vunpack.c.l.s4 1934713408
          %v912 = vunpack.c.0.s8 %v911
          %v913 = vlaneseq
          %v914 = vshrl.u32 %v913, 7
          %v915 = vsub.s32 %v912, %v914
          %v916 = vrot.slane %v902, %v915
          %v917 = vcombine.low %v893, %v909
          %v918 = vcombine.high %v893, %v909
          %v919 = vcombine.low %v900, %v916
          %v920 = vcombine.high %v900, %v916
          %v921 = vpack.c.bf16 %v917, %v917
          %v922 = vpack.c.bf16 %v918, %v918
          %v923 = vpack.c.bf16 %v919, %v919
          %v924 = vpack.c.bf16 %v920, %v920
          %925 = vst.msk [vmem:[#allocation3] sm:$0xf] %vm768, %v921
          %926 = vst.msk [vmem:[#allocation3 + $0x4] sm:$0xf] %vm768, %v922
          %927 = vst.msk [vmem:[#allocation3 + $0x8] sm:$0xf] %vm768, %v923
          %928 = vst.msk [vmem:[#allocation3 + $0xc] sm:$0xf] %vm768, %v924
          %929 = vrot.lane.b32.xlu0 %v613, 64
          %v930 = vpop.permute.xlu0 %929
          %931 = vrot.lane.b32.xlu0 %v620, 64
          %v932 = vpop.permute.xlu0 %931
          %933 = vrot.lane.b32.xlu0 %v623, 64
          %v934 = vpop.permute.xlu0 %933
          %935 = vrot.lane.b32.xlu0 %v626, 64
          %v936 = vpop.permute.xlu0 %935
          %v941 = vcombine.low %v930, %v934
          %v942 = vcombine.high %v930, %v934
          %v944 = vunpack.c.l.s4 1983009808
          %v945 = vunpack.c.0.s8 %v944
          %v946 = vlaneseq
          %v947 = vshrl.u32 %v946, 7
          %v948 = vsub.s32 %v945, %v947
          %v949 = vrot.slane %v941, %v948
          %v951 = vunpack.c.l.s4 1983009808
          %v952 = vunpack.c.0.s8 %v951
          %v953 = vlaneseq
          %v954 = vshrl.u32 %v953, 7
          %v955 = vsub.s32 %v952, %v954
          %v956 = vrot.slane %v942, %v955
          %v957 = vcombine.low %v932, %v936
          %v958 = vcombine.high %v932, %v936
          %v960 = vunpack.c.l.s4 1983009808
          %v961 = vunpack.c.0.s8 %v960
          %v962 = vlaneseq
          %v963 = vshrl.u32 %v962, 7
          %v964 = vsub.s32 %v961, %v963
          %v965 = vrot.slane %v957, %v964
          %v967 = vunpack.c.l.s4 1983009808
          %v968 = vunpack.c.0.s8 %v967
          %v969 = vlaneseq
          %v970 = vshrl.u32 %v969, 7
          %v971 = vsub.s32 %v968, %v970
          %v972 = vrot.slane %v958, %v971
          %v973 = vcombine.low %v949, %v965
          %v974 = vcombine.high %v949, %v965
          %v976 = vunpack.c.l.s4 1934713408
          %v977 = vunpack.c.0.s8 %v976
          %v978 = vlaneseq
          %v979 = vshrl.u32 %v978, 7
          %v980 = vsub.s32 %v977, %v979
          %v981 = vrot.slane %v973, %v980
          %v983 = vunpack.c.l.s4 1934713408
          %v984 = vunpack.c.0.s8 %v983
          %v985 = vlaneseq
          %v986 = vshrl.u32 %v985, 7
          %v987 = vsub.s32 %v984, %v986
          %v988 = vrot.slane %v974, %v987
          %v989 = vcombine.low %v956, %v972
          %v990 = vcombine.high %v956, %v972
          %v992 = vunpack.c.l.s4 1934713408
          %v993 = vunpack.c.0.s8 %v992
          %v994 = vlaneseq
          %v995 = vshrl.u32 %v994, 7
          %v996 = vsub.s32 %v993, %v995
          %v997 = vrot.slane %v989, %v996
          %v999 = vunpack.c.l.s4 1934713408
          %v1000 = vunpack.c.0.s8 %v999
          %v1001 = vlaneseq
          %v1002 = vshrl.u32 %v1001, 7
          %v1003 = vsub.s32 %v1000, %v1002
          %v1004 = vrot.slane %v990, %v1003
          %v1005 = vcombine.high %v981, 0.0
          %v1006 = vcombine.high %v988, 0.0
          %v1007 = vcombine.high %v997, 0.0
          %v1008 = vcombine.high %v1004, 0.0
          %v1009 = vcombine.low %v981, %v988
          %v1011 = vunpack.c.l.s4 1983009808
          %v1012 = vunpack.c.0.s8 %v1011
          %v1013 = vlaneseq
          %v1014 = vshrl.u32 %v1013, 7
          %v1015 = vsub.s32 %v1012, %v1014
          %v1016 = vrot.slane %v1009, %v1015
          %v1017 = vcombine.low %v1005, %v1006
          %v1019 = vunpack.c.l.s4 1983009808
          %v1020 = vunpack.c.0.s8 %v1019
          %v1021 = vlaneseq
          %v1022 = vshrl.u32 %v1021, 7
          %v1023 = vsub.s32 %v1020, %v1022
          %v1024 = vrot.slane %v1017, %v1023
          %v1025 = vcombine.low %v997, %v1004
          %v1027 = vunpack.c.l.s4 1983009808
          %v1028 = vunpack.c.0.s8 %v1027
          %v1029 = vlaneseq
          %v1030 = vshrl.u32 %v1029, 7
          %v1031 = vsub.s32 %v1028, %v1030
          %v1032 = vrot.slane %v1025, %v1031
          %v1033 = vcombine.low %v1007, %v1008
          %v1035 = vunpack.c.l.s4 1983009808
          %v1036 = vunpack.c.0.s8 %v1035
          %v1037 = vlaneseq
          %v1038 = vshrl.u32 %v1037, 7
          %v1039 = vsub.s32 %v1036, %v1038
          %v1040 = vrot.slane %v1033, %v1039
          %v1041 = vcombine.low %v1016, %v1024
          %v1042 = vcombine.high %v1016, %v1024
          %v1044 = vunpack.c.l.s4 1934713408
          %v1045 = vunpack.c.0.s8 %v1044
          %v1046 = vlaneseq
          %v1047 = vshrl.u32 %v1046, 7
          %v1048 = vsub.s32 %v1045, %v1047
          %v1049 = vrot.slane %v1041, %v1048
          %v1051 = vunpack.c.l.s4 1934713408
          %v1052 = vunpack.c.0.s8 %v1051
          %v1053 = vlaneseq
          %v1054 = vshrl.u32 %v1053, 7
          %v1055 = vsub.s32 %v1052, %v1054
          %v1056 = vrot.slane %v1042, %v1055
          %v1057 = vcombine.low %v1032, %v1040
          %v1058 = vcombine.high %v1032, %v1040
          %v1060 = vunpack.c.l.s4 1934713408
          %v1061 = vunpack.c.0.s8 %v1060
          %v1062 = vlaneseq
          %v1063 = vshrl.u32 %v1062, 7
          %v1064 = vsub.s32 %v1061, %v1063
          %v1065 = vrot.slane %v1057, %v1064
          %v1067 = vunpack.c.l.s4 1934713408
          %v1068 = vunpack.c.0.s8 %v1067
          %v1069 = vlaneseq
          %v1070 = vshrl.u32 %v1069, 7
          %v1071 = vsub.s32 %v1068, %v1070
          %v1072 = vrot.slane %v1058, %v1071
          %v1073 = vcombine.low %v1049, %v1065
          %v1074 = vcombine.high %v1049, %v1065
          %v1075 = vcombine.low %v1056, %v1072
          %v1076 = vcombine.high %v1056, %v1072
          %v1077 = vpack.c.bf16 %v1073, %v1073
          %v1078 = vpack.c.bf16 %v1074, %v1074
          %v1079 = vpack.c.bf16 %v1075, %v1075
          %v1080 = vpack.c.bf16 %v1076, %v1076
          %1081 = vst.msk [vmem:[#allocation4] sm:$0xf] %vm768, %v1077
          %1082 = vst.msk [vmem:[#allocation4 + $0x4] sm:$0xf] %vm768, %v1078
          %1083 = vst.msk [vmem:[#allocation4 + $0x8] sm:$0xf] %vm768, %v1079
          %1084 = vst.msk [vmem:[#allocation4 + $0xc] sm:$0xf] %vm768, %v1080
        $region104: #{tpu_custom_call.1} parent=59 // pred_fallthru
          _
        %s1085 = smul.u32 %s42, 8
        %s1086 = sshra.s32 %s1085, 3
        %s1087 = sand.u32 %s1085, 7
        %s1088 = smul.addr %s1086, 4
        %s1089 = scalar_lea.vmem [#allocation2], %s1088
        %v1090 = vld [vmem:[%s1089] sm:$0xf]
        %v1091 = vld [vmem:[%s1089 + $0x4] sm:$0xf]
        %v1092 = vld [vmem:[%s1089 + $0x8] sm:$0xf]
        %v1093 = vld [vmem:[%s1089 + $0xc] sm:$0xf]
        %v1094 = vld [vmem:[#allocation3] sm:$0xf]
        %v1095 = vld [vmem:[#allocation3 + $0x4] sm:$0xf]
        %v1096 = vld [vmem:[#allocation3 + $0x8] sm:$0xf]
        %v1097 = vld [vmem:[#allocation3 + $0xc] sm:$0xf]
        %vm1098 = vcmask 64512
        %v1100 = vsel %vm1098, %v1090, 0
        %v1103 = vsel %vm1098, %v1094, 0
        %1105 = vmatprep.subr.bf16.mxu0 0
        %1106 = vmatpush1.bf16.xpose.msra.mxu0 %v1103
        %1107 = vmatprep.subr.bf16.mxu0 0
        %1108 = vmatpush1.bf16.xpose.msra.mxu0 0
        %1109 = vmatprep.subr.bf16.mxu0 0
        %1110 = vmatpush1.bf16.xpose.msra.mxu0 0
        %1111 = vmatprep.subr.bf16.mxu0 0
        %1112 = vmatpush1.bf16.xpose.msra.mxu0 0
        %1113 = vmatprep.subr.bf16.mxu0 0
        %1114 = vmatpush1.bf16.xpose.msra.mxu0 0
        %1115 = vmatprep.subr.bf16.mxu0 0
        %1116 = vmatpush1.bf16.xpose.msra.mxu0 0
        %1117 = vmatprep.subr.bf16.mxu0 0
        %1118 = vmatpush1.bf16.xpose.msra.mxu0 0
        %1119 = vmatprep.subr.bf16.mxu0 0
        %1120 = vmatpush1.bf16.xpose.msra.mxu0 0
        %1121 = vmatprep.subr.bf16.mxu0 0
        %1122 = vmatpush1.bf16.xpose.msra.mxu0 0
        %1123 = vmatprep.subr.bf16.mxu0 0
        %1124 = vmatpush1.bf16.xpose.msra.mxu0 0
        %1125 = vmatprep.subr.bf16.mxu0 0
        %1126 = vmatpush1.bf16.xpose.msra.mxu0 0
        %1127 = vmatprep.subr.bf16.mxu0 0
        %1128 = vmatpush1.bf16.xpose.msra.mxu0 0
        %1129 = vmatprep.subr.bf16.mxu0 0
        %1130 = vmatpush1.bf16.xpose.msra.mxu0 0
        %1131 = vmatprep.subr.bf16.mxu0 0
        %1132 = vmatpush1.bf16.xpose.msra.mxu0 0
        %1133 = vmatprep.subr.bf16.mxu0 0
        %1134 = vmatpush1.bf16.xpose.msra.mxu0 0
        %1135 = vmatprep.subr.bf16.mxu0 0
        %1136 = vmatpush1.bf16.xpose.msra.mxu0 0
        %1137 = vmatprep.mubr.bf16.mxu0 0
        %1138 = vmatmul.mubr.bf16.gmra.mrb[0].mxu0 %v1100
        %v1139 = vpop.f32.mrb[0].mxu0
        %v1140 = vadd.f32 0.0, %v1139
        %v1141 = vpop.f32.mrb[0].mxu0
        %v1142 = vpop.f32.mrb[0].mxu0
        %v1143 = vpop.f32.mrb[0].mxu0
        %1144 = vdwg.mxu0
        %v1146 = vsel %vm1098, %v1091, 0
        %v1149 = vsel %vm1098, %v1095, 0
        %1151 = vmatprep.subr.bf16.mxu0 0
        %1152 = vmatpush1.bf16.xpose.msra.mxu0 %v1149
        %1153 = vmatprep.subr.bf16.mxu0 0
        %1154 = vmatpush1.bf16.xpose.msra.mxu0 0
        %1155 = vmatprep.subr.bf16.mxu0 0
        %1156 = vmatpush1.bf16.xpose.msra.mxu0 0
        %1157 = vmatprep.subr.bf16.mxu0 0
        %1158 = vmatpush1.bf16.xpose.msra.mxu0 0
        %1159 = vmatprep.subr.bf16.mxu0 0
        %1160 = vmatpush1.bf16.xpose.msra.mxu0 0
        %1161 = vmatprep.subr.bf16.mxu0 0
        %1162 = vmatpush1.bf16.xpose.msra.mxu0 0
        %1163 = vmatprep.subr.bf16.mxu0 0
        %1164 = vmatpush1.bf16.xpose.msra.mxu0 0
        %1165 = vmatprep.subr.bf16.mxu0 0
        %1166 = vmatpush1.bf16.xpose.msra.mxu0 0
        %1167 = vmatprep.subr.bf16.mxu0 0
        %1168 = vmatpush1.bf16.xpose.msra.mxu0 0
        %1169 = vmatprep.subr.bf16.mxu0 0
        %1170 = vmatpush1.bf16.xpose.msra.mxu0 0
        %1171 = vmatprep.subr.bf16.mxu0 0
        %1172 = vmatpush1.bf16.xpose.msra.mxu0 0
        %1173 = vmatprep.subr.bf16.mxu0 0
        %1174 = vmatpush1.bf16.xpose.msra.mxu0 0
        %1175 = vmatprep.subr.bf16.mxu0 0
        %1176 = vmatpush1.bf16.xpose.msra.mxu0 0
        %1177 = vmatprep.subr.bf16.mxu0 0
        %1178 = vmatpush1.bf16.xpose.msra.mxu0 0
        %1179 = vmatprep.subr.bf16.mxu0 0
        %1180 = vmatpush1.bf16.xpose.msra.mxu0 0
        %1181 = vmatprep.subr.bf16.mxu0 0
        %1182 = vmatpush1.bf16.xpose.msra.mxu0 0
        %1183 = vmatprep.mubr.bf16.mxu0 0
        %1184 = vmatmul.mubr.bf16.gmra.mrb[0].mxu0 %v1146
        %v1185 = vpop.f32.mrb[0].mxu0
        %v1186 = vadd.f32 0.0, %v1185
        %v1187 = vpop.f32.mrb[0].mxu0
        %v1188 = vpop.f32.mrb[0].mxu0
        %v1189 = vpop.f32.mrb[0].mxu0
        %1190 = vdwg.mxu0
        %v1192 = vsel %vm1098, %v1092, 0
        %v1195 = vsel %vm1098, %v1096, 0
        %1197 = vmatprep.subr.bf16.mxu0 0
        %1198 = vmatpush1.bf16.xpose.msra.mxu0 %v1195
        %1199 = vmatprep.subr.bf16.mxu0 0
        %1200 = vmatpush1.bf16.xpose.msra.mxu0 0
        %1201 = vmatprep.subr.bf16.mxu0 0
        %1202 = vmatpush1.bf16.xpose.msra.mxu0 0
        %1203 = vmatprep.subr.bf16.mxu0 0
        %1204 = vmatpush1.bf16.xpose.msra.mxu0 0
        %1205 = vmatprep.subr.bf16.mxu0 0
        %1206 = vmatpush1.bf16.xpose.msra.mxu0 0
        %1207 = vmatprep.subr.bf16.mxu0 0
        %1208 = vmatpush1.bf16.xpose.msra.mxu0 0
        %1209 = vmatprep.subr.bf16.mxu0 0
        %1210 = vmatpush1.bf16.xpose.msra.mxu0 0
        %1211 = vmatprep.subr.bf16.mxu0 0
        %1212 = vmatpush1.bf16.xpose.msra.mxu0 0
        %1213 = vmatprep.subr.bf16.mxu0 0
        %1214 = vmatpush1.bf16.xpose.msra.mxu0 0
        %1215 = vmatprep.subr.bf16.mxu0 0
        %1216 = vmatpush1.bf16.xpose.msra.mxu0 0
        %1217 = vmatprep.subr.bf16.mxu0 0
        %1218 = vmatpush1.bf16.xpose.msra.mxu0 0
        %1219 = vmatprep.subr.bf16.mxu0 0
        %1220 = vmatpush1.bf16.xpose.msra.mxu0 0
        %1221 = vmatprep.subr.bf16.mxu0 0
        %1222 = vmatpush1.bf16.xpose.msra.mxu0 0
        %1223 = vmatprep.subr.bf16.mxu0 0
        %1224 = vmatpush1.bf16.xpose.msra.mxu0 0
        %1225 = vmatprep.subr.bf16.mxu0 0
        %1226 = vmatpush1.bf16.xpose.msra.mxu0 0
        %1227 = vmatprep.subr.bf16.mxu0 0
        %1228 = vmatpush1.bf16.xpose.msra.mxu0 0
        %1229 = vmatprep.mubr.bf16.mxu0 0
        %1230 = vmatmul.mubr.bf16.gmra.mrb[0].mxu0 %v1192
        %v1231 = vpop.f32.mrb[0].mxu0
        %v1232 = vadd.f32 0.0, %v1231
        %v1233 = vpop.f32.mrb[0].mxu0
        %v1234 = vpop.f32.mrb[0].mxu0
        %v1235 = vpop.f32.mrb[0].mxu0
        %1236 = vdwg.mxu0
        %v1238 = vsel %vm1098, %v1093, 0
        %v1241 = vsel %vm1098, %v1097, 0
        %1243 = vmatprep.subr.bf16.mxu0 0
        %1244 = vmatpush1.bf16.xpose.msra.mxu0 %v1241
        %1245 = vmatprep.subr.bf16.mxu0 0
        %1246 = vmatpush1.bf16.xpose.msra.mxu0 0
        %1247 = vmatprep.subr.bf16.mxu0 0
        %1248 = vmatpush1.bf16.xpose.msra.mxu0 0
        %1249 = vmatprep.subr.bf16.mxu0 0
        %1250 = vmatpush1.bf16.xpose.msra.mxu0 0
        %1251 = vmatprep.subr.bf16.mxu0 0
        %1252 = vmatpush1.bf16.xpose.msra.mxu0 0
        %1253 = vmatprep.subr.bf16.mxu0 0
        %1254 = vmatpush1.bf16.xpose.msra.mxu0 0
        %1255 = vmatprep.subr.bf16.mxu0 0
        %1256 = vmatpush1.bf16.xpose.msra.mxu0 0
        %1257 = vmatprep.subr.bf16.mxu0 0
        %1258 = vmatpush1.bf16.xpose.msra.mxu0 0
        %1259 = vmatprep.subr.bf16.mxu0 0
        %1260 = vmatpush1.bf16.xpose.msra.mxu0 0
        %1261 = vmatprep.subr.bf16.mxu0 0
        %1262 = vmatpush1.bf16.xpose.msra.mxu0 0
        %1263 = vmatprep.subr.bf16.mxu0 0
        %1264 = vmatpush1.bf16.xpose.msra.mxu0 0
        %1265 = vmatprep.subr.bf16.mxu0 0
        %1266 = vmatpush1.bf16.xpose.msra.mxu0 0
        %1267 = vmatprep.subr.bf16.mxu0 0
        %1268 = vmatpush1.bf16.xpose.msra.mxu0 0
        %1269 = vmatprep.subr.bf16.mxu0 0
        %1270 = vmatpush1.bf16.xpose.msra.mxu0 0
        %1271 = vmatprep.subr.bf16.mxu0 0
        %1272 = vmatpush1.bf16.xpose.msra.mxu0 0
        %1273 = vmatprep.subr.bf16.mxu0 0
        %1274 = vmatpush1.bf16.xpose.msra.mxu0 0
        %1275 = vmatprep.mubr.bf16.mxu0 0
        %1276 = vmatmul.mubr.bf16.gmra.mrb[0].mxu0 %v1238
        %v1277 = vpop.f32.mrb[0].mxu0
        %v1278 = vadd.f32 0.0, %v1277
        %v1279 = vpop.f32.mrb[0].mxu0
        %v1280 = vpop.f32.mrb[0].mxu0
        %v1281 = vpop.f32.mrb[0].mxu0
        %1282 = vdwg.mxu0
        %v1283 = vmul.f32 %v1140, 0.35355338
        %v1284 = vmul.f32 %v1186, 0.35355338
        %v1285 = vmul.f32 %v1232, 0.35355338
        %v1286 = vmul.f32 %v1278, 0.35355338
        %v1287 = vlaneseq
        %v1288 = vand.u32 %v1287, 127
        %v1289 = vstv %s519
        %vm1290 = vcmp.lt.s32.totalorder %v1288, %v1289
        %v1291 = vsel %vm1290, 1, 0
        %vm1292 = vcmp.eq.s32.totalorder %v1291, 1
        %v1293 = vsel %vm1292, %v1283, -1e+09
        %v1294 = vsel %vm1292, %v1284, -1e+09
        %v1295 = vsel %vm1292, %v1285, -1e+09
        %v1296 = vsel %vm1292, %v1286, -1e+09
        %v1297 = vsel %vm1098, %v1293, -inf
        %1298 = vmax.xlane.f32.xlu0 %v1297
        %v1299 = vpop.xlane.xlu0 %1298
        %v1300 = vsel %vm1098, %v1294, -inf
        %1301 = vmax.xlane.f32.xlu0 %v1300
        %v1302 = vpop.xlane.xlu0 %1301
        %v1303 = vsel %vm1098, %v1295, -inf
        %1304 = vmax.xlane.f32.xlu0 %v1303
        %v1305 = vpop.xlane.xlu0 %1304
        %v1306 = vsel %vm1098, %v1296, -inf
        %1307 = vmax.xlane.f32.xlu0 %v1306
        %v1308 = vpop.xlane.xlu0 %1307
        %v1309 = vsub.f32 %v1293, %v1299
        %v1310 = vsub.f32 %v1294, %v1302
        %v1311 = vsub.f32 %v1295, %v1305
        %v1312 = vsub.f32 %v1296, %v1308
        %v1313 = vmul.f32 %v1309, 1.442695
        %v1314 = vpow.pop %v1313
        %v1315 = vmul.f32 %v1310, 1.442695
        %v1316 = vpow.pop %v1315
        %v1317 = vmul.f32 %v1311, 1.442695
        %v1318 = vpow.pop %v1317
        %v1319 = vmul.f32 %v1312, 1.442695
        %v1320 = vpow.pop %v1319
        %v1321 = vsel %vm1098, %v1314, 0.0
        %1322 = vadd.xlane.f32.xlu0 %v1321
        %v1323 = vpop.xlane.xlu0 %1322
        %v1324 = vsel %vm1098, %v1316, 0.0
        %1325 = vadd.xlane.f32.xlu0 %v1324
        %v1326 = vpop.xlane.xlu0 %1325
        %v1327 = vsel %vm1098, %v1318, 0.0
        %1328 = vadd.xlane.f32.xlu0 %v1327
        %v1329 = vpop.xlane.xlu0 %1328
        %v1330 = vsel %vm1098, %v1320, 0.0
        %1331 = vadd.xlane.f32.xlu0 %v1330
        %v1332 = vpop.xlane.xlu0 %1331
        %v1333 = vrcp.pop %v1323
        %v1334 = vrcp.pop %v1326
        %v1335 = vrcp.pop %v1329
        %v1336 = vrcp.pop %v1332
        %v1337 = vmul.f32 %v1314, %v1333
        %v1338 = vmul.f32 %v1316, %v1334
        %v1339 = vmul.f32 %v1318, %v1335
        %v1340 = vmul.f32 %v1320, %v1336
        %v1341 = vpack.c.bf16 %v1337, %v1337
        %v1342 = vpack.c.bf16 %v1338, %v1338
        %v1343 = vpack.c.bf16 %v1339, %v1339
        %v1344 = vpack.c.bf16 %v1340, %v1340
        %v1345 = vld [vmem:[#allocation4] sm:$0xf]
        %v1346 = vld [vmem:[#allocation4 + $0x4] sm:$0xf]
        %v1347 = vld [vmem:[#allocation4 + $0x8] sm:$0xf]
        %v1348 = vld [vmem:[#allocation4 + $0xc] sm:$0xf]
        %v1350 = vsel %vm1098, %v1341, 0
        %vm1352 = vcmask 1043456
        %v1354 = vsel %vm1352, %v1345, 0
        %1356 = vmatprep.subr.bf16.mxu0 0
        %1357 = vmatpush1.bf16.msra.mxu0 %v1354
        %1358 = vmatprep.subr.bf16.mxu0 0
        %1359 = vmatpush1.bf16.msra.mxu0 0
        %1360 = vmatprep.subr.bf16.mxu0 0
        %1361 = vmatpush1.bf16.msra.mxu0 0
        %1362 = vmatprep.subr.bf16.mxu0 0
        %1363 = vmatpush1.bf16.msra.mxu0 0
        %1364 = vmatprep.subr.bf16.mxu0 0
        %1365 = vmatpush1.bf16.msra.mxu0 0
        %1366 = vmatprep.subr.bf16.mxu0 0
        %1367 = vmatpush1.bf16.msra.mxu0 0
        %1368 = vmatprep.subr.bf16.mxu0 0
        %1369 = vmatpush1.bf16.msra.mxu0 0
        %1370 = vmatprep.subr.bf16.mxu0 0
        %1371 = vmatpush1.bf16.msra.mxu0 0
        %1372 = vmatprep.subr.bf16.mxu0 0
        %1373 = vmatpush1.bf16.msra.mxu0 0
        %1374 = vmatprep.subr.bf16.mxu0 0
        %1375 = vmatpush1.bf16.msra.mxu0 0
        %1376 = vmatprep.subr.bf16.mxu0 0
        %1377 = vmatpush1.bf16.msra.mxu0 0
        %1378 = vmatprep.subr.bf16.mxu0 0
        %1379 = vmatpush1.bf16.msra.mxu0 0
        %1380 = vmatprep.subr.bf16.mxu0 0
        %1381 = vmatpush1.bf16.msra.mxu0 0
        %1382 = vmatprep.subr.bf16.mxu0 0
        %1383 = vmatpush1.bf16.msra.mxu0 0
        %1384 = vmatprep.subr.bf16.mxu0 0
        %1385 = vmatpush1.bf16.msra.mxu0 0
        %1386 = vmatprep.subr.bf16.mxu0 0
        %1387 = vmatpush1.bf16.msra.mxu0 0
        %1388 = vmatprep.mubr.bf16.mxu0 0
        %1389 = vmatmul.mubr.bf16.gmra.mrb[0].mxu0 %v1350
        %v1390 = vpop.f32.mrb[0].mxu0
        %v1391 = vadd.f32 0.0, %v1390
        %v1392 = vpop.f32.mrb[0].mxu0
        %v1393 = vpop.f32.mrb[0].mxu0
        %v1394 = vpop.f32.mrb[0].mxu0
        %1395 = vdwg.mxu0
        %v1397 = vsel %vm1098, %v1342, 0
        %v1400 = vsel %vm1352, %v1346, 0
        %1402 = vmatprep.subr.bf16.mxu0 0
        %1403 = vmatpush1.bf16.msra.mxu0 %v1400
        %1404 = vmatprep.subr.bf16.mxu0 0
        %1405 = vmatpush1.bf16.msra.mxu0 0
        %1406 = vmatprep.subr.bf16.mxu0 0
        %1407 = vmatpush1.bf16.msra.mxu0 0
        %1408 = vmatprep.subr.bf16.mxu0 0
        %1409 = vmatpush1.bf16.msra.mxu0 0
        %1410 = vmatprep.subr.bf16.mxu0 0
        %1411 = vmatpush1.bf16.msra.mxu0 0
        %1412 = vmatprep.subr.bf16.mxu0 0
        %1413 = vmatpush1.bf16.msra.mxu0 0
        %1414 = vmatprep.subr.bf16.mxu0 0
        %1415 = vmatpush1.bf16.msra.mxu0 0
        %1416 = vmatprep.subr.bf16.mxu0 0
        %1417 = vmatpush1.bf16.msra.mxu0 0
        %1418 = vmatprep.subr.bf16.mxu0 0
        %1419 = vmatpush1.bf16.msra.mxu0 0
        %1420 = vmatprep.subr.bf16.mxu0 0
        %1421 = vmatpush1.bf16.msra.mxu0 0
        %1422 = vmatprep.subr.bf16.mxu0 0
        %1423 = vmatpush1.bf16.msra.mxu0 0
        %1424 = vmatprep.subr.bf16.mxu0 0
        %1425 = vmatpush1.bf16.msra.mxu0 0
        %1426 = vmatprep.subr.bf16.mxu0 0
        %1427 = vmatpush1.bf16.msra.mxu0 0
        %1428 = vmatprep.subr.bf16.mxu0 0
        %1429 = vmatpush1.bf16.msra.mxu0 0
        %1430 = vmatprep.subr.bf16.mxu0 0
        %1431 = vmatpush1.bf16.msra.mxu0 0
        %1432 = vmatprep.subr.bf16.mxu0 0
        %1433 = vmatpush1.bf16.msra.mxu0 0
        %1434 = vmatprep.mubr.bf16.mxu0 0
        %1435 = vmatmul.mubr.bf16.gmra.mrb[0].mxu0 %v1397
        %v1436 = vpop.f32.mrb[0].mxu0
        %v1437 = vadd.f32 0.0, %v1436
        %v1438 = vpop.f32.mrb[0].mxu0
        %v1439 = vpop.f32.mrb[0].mxu0
        %v1440 = vpop.f32.mrb[0].mxu0
        %1441 = vdwg.mxu0
        %v1443 = vsel %vm1098, %v1343, 0
        %v1446 = vsel %vm1352, %v1347, 0
        %1448 = vmatprep.subr.bf16.mxu0 0
        %1449 = vmatpush1.bf16.msra.mxu0 %v1446
        %1450 = vmatprep.subr.bf16.mxu0 0
        %1451 = vmatpush1.bf16.msra.mxu0 0
        %1452 = vmatprep.subr.bf16.mxu0 0
        %1453 = vmatpush1.bf16.msra.mxu0 0
        %1454 = vmatprep.subr.bf16.mxu0 0
        %1455 = vmatpush1.bf16.msra.mxu0 0
        %1456 = vmatprep.subr.bf16.mxu0 0
        %1457 = vmatpush1.bf16.msra.mxu0 0
        %1458 = vmatprep.subr.bf16.mxu0 0
        %1459 = vmatpush1.bf16.msra.mxu0 0
        %1460 = vmatprep.subr.bf16.mxu0 0
        %1461 = vmatpush1.bf16.msra.mxu0 0
        %1462 = vmatprep.subr.bf16.mxu0 0
        %1463 = vmatpush1.bf16.msra.mxu0 0
        %1464 = vmatprep.subr.bf16.mxu0 0
        %1465 = vmatpush1.bf16.msra.mxu0 0
        %1466 = vmatprep.subr.bf16.mxu0 0
        %1467 = vmatpush1.bf16.msra.mxu0 0
        %1468 = vmatprep.subr.bf16.mxu0 0
        %1469 = vmatpush1.bf16.msra.mxu0 0
        %1470 = vmatprep.subr.bf16.mxu0 0
        %1471 = vmatpush1.bf16.msra.mxu0 0
        %1472 = vmatprep.subr.bf16.mxu0 0
        %1473 = vmatpush1.bf16.msra.mxu0 0
        %1474 = vmatprep.subr.bf16.mxu0 0
        %1475 = vmatpush1.bf16.msra.mxu0 0
        %1476 = vmatprep.subr.bf16.mxu0 0
        %1477 = vmatpush1.bf16.msra.mxu0 0
        %1478 = vmatprep.subr.bf16.mxu0 0
        %1479 = vmatpush1.bf16.msra.mxu0 0
        %1480 = vmatprep.mubr.bf16.mxu0 0
        %1481 = vmatmul.mubr.bf16.gmra.mrb[0].mxu0 %v1443
        %v1482 = vpop.f32.mrb[0].mxu0
        %v1483 = vadd.f32 0.0, %v1482
        %v1484 = vpop.f32.mrb[0].mxu0
        %v1485 = vpop.f32.mrb[0].mxu0
        %v1486 = vpop.f32.mrb[0].mxu0
        %1487 = vdwg.mxu0
        %v1489 = vsel %vm1098, %v1344, 0
        %v1492 = vsel %vm1352, %v1348, 0
        %1494 = vmatprep.subr.bf16.mxu0 0
        %1495 = vmatpush1.bf16.msra.mxu0 %v1492
        %1496 = vmatprep.subr.bf16.mxu0 0
        %1497 = vmatpush1.bf16.msra.mxu0 0
        %1498 = vmatprep.subr.bf16.mxu0 0
        %1499 = vmatpush1.bf16.msra.mxu0 0
        %1500 = vmatprep.subr.bf16.mxu0 0
        %1501 = vmatpush1.bf16.msra.mxu0 0
        %1502 = vmatprep.subr.bf16.mxu0 0
        %1503 = vmatpush1.bf16.msra.mxu0 0
        %1504 = vmatprep.subr.bf16.mxu0 0
        %1505 = vmatpush1.bf16.msra.mxu0 0
        %1506 = vmatprep.subr.bf16.mxu0 0
        %1507 = vmatpush1.bf16.msra.mxu0 0
        %1508 = vmatprep.subr.bf16.mxu0 0
        %1509 = vmatpush1.bf16.msra.mxu0 0
        %1510 = vmatprep.subr.bf16.mxu0 0
        %1511 = vmatpush1.bf16.msra.mxu0 0
        %1512 = vmatprep.subr.bf16.mxu0 0
        %1513 = vmatpush1.bf16.msra.mxu0 0
        %1514 = vmatprep.subr.bf16.mxu0 0
        %1515 = vmatpush1.bf16.msra.mxu0 0
        %1516 = vmatprep.subr.bf16.mxu0 0
        %1517 = vmatpush1.bf16.msra.mxu0 0
        %1518 = vmatprep.subr.bf16.mxu0 0
        %1519 = vmatpush1.bf16.msra.mxu0 0
        %1520 = vmatprep.subr.bf16.mxu0 0
        %1521 = vmatpush1.bf16.msra.mxu0 0
        %1522 = vmatprep.subr.bf16.mxu0 0
        %1523 = vmatpush1.bf16.msra.mxu0 0
        %1524 = vmatprep.subr.bf16.mxu0 0
        %1525 = vmatpush1.bf16.msra.mxu0 0
        %1526 = vmatprep.mubr.bf16.mxu0 0
        %1527 = vmatmul.mubr.bf16.gmra.mrb[0].mxu0 %v1489
        %v1528 = vpop.f32.mrb[0].mxu0
        %v1529 = vadd.f32 0.0, %v1528
        %v1530 = vpop.f32.mrb[0].mxu0
        %v1531 = vpop.f32.mrb[0].mxu0
        %v1532 = vpop.f32.mrb[0].mxu0
        %1533 = vdwg.mxu0
        %v1534 = vcombine.low %v1391, %v1483
        %v1535 = vcombine.high %v1391, %v1483
        %v1537 = vunpack.c.l.s4 1983009808
        %v1538 = vunpack.c.0.s8 %v1537
        %v1539 = vlaneseq
        %v1540 = vshrl.u32 %v1539, 7
        %v1541 = vsub.s32 %v1538, %v1540
        %v1542 = vrot.slane %v1534, %v1541
        %v1544 = vunpack.c.l.s4 1983009808
        %v1545 = vunpack.c.0.s8 %v1544
        %v1546 = vlaneseq
        %v1547 = vshrl.u32 %v1546, 7
        %v1548 = vsub.s32 %v1545, %v1547
        %v1549 = vrot.slane %v1535, %v1548
        %v1550 = vcombine.low %v1437, %v1529
        %v1551 = vcombine.high %v1437, %v1529
        %v1553 = vunpack.c.l.s4 1983009808
        %v1554 = vunpack.c.0.s8 %v1553
        %v1555 = vlaneseq
        %v1556 = vshrl.u32 %v1555, 7
        %v1557 = vsub.s32 %v1554, %v1556
        %v1558 = vrot.slane %v1550, %v1557
        %v1560 = vunpack.c.l.s4 1983009808
        %v1561 = vunpack.c.0.s8 %v1560
        %v1562 = vlaneseq
        %v1563 = vshrl.u32 %v1562, 7
        %v1564 = vsub.s32 %v1561, %v1563
        %v1565 = vrot.slane %v1551, %v1564
        %v1566 = vcombine.low %v1542, %v1558
        %v1567 = vcombine.high %v1542, %v1558
        %v1569 = vunpack.c.l.s4 1934713408
        %v1570 = vunpack.c.0.s8 %v1569
        %v1571 = vlaneseq
        %v1572 = vshrl.u32 %v1571, 7
        %v1573 = vsub.s32 %v1570, %v1572
        %v1574 = vrot.slane %v1566, %v1573
        %v1576 = vunpack.c.l.s4 1934713408
        %v1577 = vunpack.c.0.s8 %v1576
        %v1578 = vlaneseq
        %v1579 = vshrl.u32 %v1578, 7
        %v1580 = vsub.s32 %v1577, %v1579
        %v1581 = vrot.slane %v1567, %v1580
        %v1582 = vcombine.low %v1549, %v1565
        %v1583 = vcombine.high %v1549, %v1565
        %v1585 = vunpack.c.l.s4 1934713408
        %v1586 = vunpack.c.0.s8 %v1585
        %v1587 = vlaneseq
        %v1588 = vshrl.u32 %v1587, 7
        %v1589 = vsub.s32 %v1586, %v1588
        %v1590 = vrot.slane %v1582, %v1589
        %v1592 = vunpack.c.l.s4 1934713408
        %v1593 = vunpack.c.0.s8 %v1592
        %v1594 = vlaneseq
        %v1595 = vshrl.u32 %v1594, 7
        %v1596 = vsub.s32 %v1593, %v1595
        %v1597 = vrot.slane %v1583, %v1596
        %v1598 = vcombine.high %v1574, 0.0
        %v1599 = vcombine.high %v1581, 0.0
        %v1600 = vcombine.high %v1590, 0.0
        %v1601 = vcombine.high %v1597, 0.0
        %v1602 = vcombine.low %v1574, %v1581
        %v1604 = vunpack.c.l.s4 1983009808
        %v1605 = vunpack.c.0.s8 %v1604
        %v1606 = vlaneseq
        %v1607 = vshrl.u32 %v1606, 7
        %v1608 = vsub.s32 %v1605, %v1607
        %v1609 = vrot.slane %v1602, %v1608
        %v1610 = vcombine.low %v1598, %v1599
        %v1612 = vunpack.c.l.s4 1983009808
        %v1613 = vunpack.c.0.s8 %v1612
        %v1614 = vlaneseq
        %v1615 = vshrl.u32 %v1614, 7
        %v1616 = vsub.s32 %v1613, %v1615
        %v1617 = vrot.slane %v1610, %v1616
        %v1618 = vcombine.low %v1590, %v1597
        %v1620 = vunpack.c.l.s4 1983009808
        %v1621 = vunpack.c.0.s8 %v1620
        %v1622 = vlaneseq
        %v1623 = vshrl.u32 %v1622, 7
        %v1624 = vsub.s32 %v1621, %v1623
        %v1625 = vrot.slane %v1618, %v1624
        %v1626 = vcombine.low %v1600, %v1601
        %v1628 = vunpack.c.l.s4 1983009808
        %v1629 = vunpack.c.0.s8 %v1628
        %v1630 = vlaneseq
        %v1631 = vshrl.u32 %v1630, 7
        %v1632 = vsub.s32 %v1629, %v1631
        %v1633 = vrot.slane %v1626, %v1632
        %v1634 = vcombine.low %v1609, %v1617
        %v1635 = vcombine.high %v1609, %v1617
        %v1637 = vunpack.c.l.s4 1934713408
        %v1638 = vunpack.c.0.s8 %v1637
        %v1639 = vlaneseq
        %v1640 = vshrl.u32 %v1639, 7
        %v1641 = vsub.s32 %v1638, %v1640
        %v1642 = vrot.slane %v1634, %v1641
        %v1644 = vunpack.c.l.s4 1934713408
        %v1645 = vunpack.c.0.s8 %v1644
        %v1646 = vlaneseq
        %v1647 = vshrl.u32 %v1646, 7
        %v1648 = vsub.s32 %v1645, %v1647
        %v1649 = vrot.slane %v1635, %v1648
        %v1650 = vcombine.low %v1625, %v1633
        %v1651 = vcombine.high %v1625, %v1633
        %v1653 = vunpack.c.l.s4 1934713408
        %v1654 = vunpack.c.0.s8 %v1653
        %v1655 = vlaneseq
        %v1656 = vshrl.u32 %v1655, 7
        %v1657 = vsub.s32 %v1654, %v1656
        %v1658 = vrot.slane %v1650, %v1657
        %v1660 = vunpack.c.l.s4 1934713408
        %v1661 = vunpack.c.0.s8 %v1660
        %v1662 = vlaneseq
        %v1663 = vshrl.u32 %v1662, 7
        %v1664 = vsub.s32 %v1661, %v1663
        %v1665 = vrot.slane %v1651, %v1664
        %v1666 = vcombine.low %v1642, %v1658
        %v1667 = vcombine.high %v1642, %v1658
        %v1668 = vcombine.low %v1649, %v1665
        %v1669 = vcombine.high %v1649, %v1665
        %1671 = vrot.lane.b32.xlu0 %v1667, 8
        %v1672 = vpop.permute.xlu0 %1671
        %1675 = vrot.lane.b32.xlu0 %v1668, 16
        %v1676 = vpop.permute.xlu0 %1675
        %1679 = vrot.lane.b32.xlu0 %v1669, 24
        %v1680 = vpop.permute.xlu0 %1679
        %v1682 = vsel %vm1098, %v1666, %v1672
        %vm1683 = vcmask 130048
        %v1684 = vsel %vm1683, %v1682, %v1676
        %vm1685 = vcmask 195584
        %v1686 = vsel %vm1685, %v1684, %v1680
        %v1687 = vpack.c.bf16 %v1686, %v1686
        %v1688 = vld [vmem:[#allocation14] sm:$0xf]
        %v1689 = vld [vmem:[#allocation14 + $0x4] sm:$0xf]
        %v1690 = vld [vmem:[#allocation14 + $0x8] sm:$0xf]
        %v1691 = vld [vmem:[#allocation14 + $0xc] sm:$0xf]
        %v1692 = vld [vmem:[#allocation16] sm:$0x1]
        %v1694 = vlaneseq
        %v1695 = vshrl.u32 %v1694, 7
        %v1696 = vsub.s32 0, %v1695
        %v1697 = vrot.slane %v1692, %v1696
        %v1703 = vunpack.c.l.b16 %v1688
        %v1704 = vunpack.c.l.b16 %v1689
        %v1705 = vunpack.c.l.b16 %v1690
        %v1706 = vunpack.c.l.b16 %v1691
        %v1707 = vpack.c.b16 %v1704, %v1703
        %v1708 = vpack.c.b16 %v1706, %v1705
        %vm1711 = vcmask 261120
        %v1713 = vsel %vm1711, %v1687, 0
        %1715 = vmatprep.subr.bf16.mxu0 0
        %1716 = vmatpush1.bf16.msra.mxu0 %v1707
        %1717 = vmatprep.subr.bf16.mxu0 0
        %1718 = vmatpush1.bf16.msra.mxu0 %v1708
        %1719 = vmatprep.subr.bf16.mxu0 0
        %1720 = vmatpush1.bf16.msra.mxu0 0
        %1721 = vmatprep.subr.bf16.mxu0 0
        %1722 = vmatpush1.bf16.msra.mxu0 0
        %1723 = vmatprep.subr.bf16.mxu0 0
        %1724 = vmatpush1.bf16.msra.mxu0 0
        %1725 = vmatprep.subr.bf16.mxu0 0
        %1726 = vmatpush1.bf16.msra.mxu0 0
        %1727 = vmatprep.subr.bf16.mxu0 0
        %1728 = vmatpush1.bf16.msra.mxu0 0
        %1729 = vmatprep.subr.bf16.mxu0 0
        %1730 = vmatpush1.bf16.msra.mxu0 0
        %1731 = vmatprep.subr.bf16.mxu0 0
        %1732 = vmatpush1.bf16.msra.mxu0 0
        %1733 = vmatprep.subr.bf16.mxu0 0
        %1734 = vmatpush1.bf16.msra.mxu0 0
        %1735 = vmatprep.subr.bf16.mxu0 0
        %1736 = vmatpush1.bf16.msra.mxu0 0
        %1737 = vmatprep.subr.bf16.mxu0 0
        %1738 = vmatpush1.bf16.msra.mxu0 0
        %1739 = vmatprep.subr.bf16.mxu0 0
        %1740 = vmatpush1.bf16.msra.mxu0 0
        %1741 = vmatprep.subr.bf16.mxu0 0
        %1742 = vmatpush1.bf16.msra.mxu0 0
        %1743 = vmatprep.subr.bf16.mxu0 0
        %1744 = vmatpush1.bf16.msra.mxu0 0
        %1745 = vmatprep.subr.bf16.mxu0 0
        %1746 = vmatpush1.bf16.msra.mxu0 0
        %1747 = vmatprep.mubr.bf16.mxu0 0
        %1748 = vmatmul.mubr.bf16.gmra.mrb[0].mxu0 %v1713
        %v1749 = vpop.f32.mrb[0].mxu0
        %v1750 = vadd.f32 %v1697, %v1749
        %v1751 = vpop.f32.mrb[0].mxu0
        %v1752 = vpop.f32.mrb[0].mxu0
        %v1753 = vpop.f32.mrb[0].mxu0
        %1754 = vdwg.mxu0
        %s1755 = scalar_lea.vmem %s440, %s1085 [#allocation7]
        %v1756 = vld [vmem:[%s1755] sm:$0xff]
        %v1757 = vadd.f32 %v1756, %v1750
        %v1758 = vsel %vm1711, %v1757, 0.0
        %1759 = vadd.xlane.f32.xlu0 %v1758
        %v1760 = vpop.xlane.xlu0 %1759
        %v1761 = vrcp.pop 32.0
        %v1762 = vmul.f32 %v1760, %v1761
        %v1763 = vsub.f32 %v1757, %v1762
        %v1764 = vmul.f32 %v1763, %v1763
        %v1765 = vsel %vm1711, %v1764, 0.0
        %1766 = vadd.xlane.f32.xlu0 %v1765
        %v1767 = vpop.xlane.xlu0 %1766
        %v1768 = vmul.f32 %v1767, 0.032258064
        %v1769 = vrsqrt.pop %v1768
        %v1770 = vmul.f32 %v1768, %v1769
        %vm1771 = vcmp.eq.f32.partialorder %v1768, inf
        %v1772 = vsel %vm1771, %v1768, %v1770
        %vm1773 = vcmp.eq.f32.partialorder %v1768, 0.0
        %v1774 = vand.u32 %v1768, 2147483648
        %v1775 = vsel %vm1773, %v1774, %v1772
        %v1776 = vadd.f32 %v1775, 1e-06
        %v1777 = vrcp.pop %v1776
        %v1778 = vstv %s517
        %v1779 = vmul.f32 %v1778, %v1763
        %v1780 = vmul.f32 %v1779, %v1777
        %v1781 = vstv %s518
        %v1782 = vadd.f32 %v1780, %v1781
        %v1783 = vpack.c.bf16 %v1782, %v1782
        %v1784 = vld [vmem:[#allocation17] sm:$0xf]
        %v1785 = vld [vmem:[#allocation17 + $0x4] sm:$0xf]
        %v1786 = vld [vmem:[#allocation17 + $0x8] sm:$0xf]
        %v1787 = vld [vmem:[#allocation17 + $0xc] sm:$0xf]
        %v1788 = vld [vmem:[#allocation19] sm:$0x1]
        %v1790 = vlaneseq
        %v1791 = vshrl.u32 %v1790, 7
        %v1792 = vsub.s32 0, %v1791
        %v1793 = vrot.slane %v1788, %v1792
        %v1799 = vunpack.c.l.b16 %v1784
        %v1800 = vunpack.c.l.b16 %v1785
        %v1801 = vunpack.c.l.b16 %v1786
        %v1802 = vunpack.c.l.b16 %v1787
        %v1803 = vpack.c.b16 %v1800, %v1799
        %v1804 = vpack.c.b16 %v1802, %v1801
        %v1808 = vsel %vm1711, %v1783, 0
        %1810 = vmatprep.subr.bf16.mxu0 0
        %1811 = vmatpush1.bf16.msra.mxu0 %v1803
        %1812 = vmatprep.subr.bf16.mxu0 0
        %1813 = vmatpush1.bf16.msra.mxu0 %v1804
        %1814 = vmatprep.subr.bf16.mxu0 0
        %1815 = vmatpush1.bf16.msra.mxu0 0
        %1816 = vmatprep.subr.bf16.mxu0 0
        %1817 = vmatpush1.bf16.msra.mxu0 0
        %1818 = vmatprep.subr.bf16.mxu0 0
        %1819 = vmatpush1.bf16.msra.mxu0 0
        %1820 = vmatprep.subr.bf16.mxu0 0
        %1821 = vmatpush1.bf16.msra.mxu0 0
        %1822 = vmatprep.subr.bf16.mxu0 0
        %1823 = vmatpush1.bf16.msra.mxu0 0
        %1824 = vmatprep.subr.bf16.mxu0 0
        %1825 = vmatpush1.bf16.msra.mxu0 0
        %1826 = vmatprep.subr.bf16.mxu0 0
        %1827 = vmatpush1.bf16.msra.mxu0 0
        %1828 = vmatprep.subr.bf16.mxu0 0
        %1829 = vmatpush1.bf16.msra.mxu0 0
        %1830 = vmatprep.subr.bf16.mxu0 0
        %1831 = vmatpush1.bf16.msra.mxu0 0
        %1832 = vmatprep.subr.bf16.mxu0 0
        %1833 = vmatpush1.bf16.msra.mxu0 0
        %1834 = vmatprep.subr.bf16.mxu0 0
        %1835 = vmatpush1.bf16.msra.mxu0 0
        %1836 = vmatprep.subr.bf16.mxu0 0
        %1837 = vmatpush1.bf16.msra.mxu0 0
        %1838 = vmatprep.subr.bf16.mxu0 0
        %1839 = vmatpush1.bf16.msra.mxu0 0
        %1840 = vmatprep.subr.bf16.mxu0 0
        %1841 = vmatpush1.bf16.msra.mxu0 0
        %1842 = vmatprep.mubr.bf16.mxu0 0
        %1843 = vmatmul.mubr.bf16.gmra.mrb[0].mxu0 %v1808
        %v1844 = vpop.f32.mrb[0].mxu0
        %v1845 = vadd.f32 %v1793, %v1844
        %v1846 = vpop.f32.mrb[0].mxu0
        %v1847 = vpop.f32.mrb[0].mxu0
        %v1848 = vpop.f32.mrb[0].mxu0
        %1849 = vdwg.mxu0
        %v1850 = vmax.f32 %v1845, 0.0
        %v1851 = vpack.c.bf16 %v1850, %v1850
        %v1852 = vld [vmem:[#allocation20] sm:$0xf]
        %v1853 = vld [vmem:[#allocation20 + $0x4] sm:$0xf]
        %v1854 = vld [vmem:[#allocation20 + $0x8] sm:$0xf]
        %v1855 = vld [vmem:[#allocation20 + $0xc] sm:$0xf]
        %v1856 = vld [vmem:[#allocation20 + $0x10] sm:$0xf]
        %v1857 = vld [vmem:[#allocation20 + $0x14] sm:$0xf]
        %v1858 = vld [vmem:[#allocation20 + $0x18] sm:$0xf]
        %v1859 = vld [vmem:[#allocation20 + $0x1c] sm:$0xf]
        %v1860 = vld [vmem:[#allocation22] sm:$0x1]
        %v1862 = vlaneseq
        %v1863 = vshrl.u32 %v1862, 7
        %v1864 = vsub.s32 0, %v1863
        %v1865 = vrot.slane %v1860, %v1864
        %v1875 = vunpack.c.l.b16 %v1852
        %v1876 = vunpack.c.l.b16 %v1853
        %v1877 = vunpack.c.l.b16 %v1854
        %v1878 = vunpack.c.l.b16 %v1855
        %v1879 = vunpack.c.l.b16 %v1856
        %v1880 = vunpack.c.l.b16 %v1857
        %v1881 = vunpack.c.l.b16 %v1858
        %v1882 = vunpack.c.l.b16 %v1859
        %v1883 = vpack.c.b16 %v1876, %v1875
        %v1884 = vpack.c.b16 %v1878, %v1877
        %v1885 = vpack.c.b16 %v1880, %v1879
        %v1886 = vpack.c.b16 %v1882, %v1881
        %vm1891 = vcmask 523264
        %v1893 = vsel %vm1891, %v1851, 0
        %1895 = vmatprep.subr.bf16.mxu0 0
        %1896 = vmatpush1.bf16.msra.mxu0 %v1883
        %1897 = vmatprep.subr.bf16.mxu0 0
        %1898 = vmatpush1.bf16.msra.mxu0 %v1884
        %1899 = vmatprep.subr.bf16.mxu0 0
        %1900 = vmatpush1.bf16.msra.mxu0 %v1885
        %1901 = vmatprep.subr.bf16.mxu0 0
        %1902 = vmatpush1.bf16.msra.mxu0 %v1886
        %1903 = vmatprep.subr.bf16.mxu0 0
        %1904 = vmatpush1.bf16.msra.mxu0 0
        %1905 = vmatprep.subr.bf16.mxu0 0
        %1906 = vmatpush1.bf16.msra.mxu0 0
        %1907 = vmatprep.subr.bf16.mxu0 0
        %1908 = vmatpush1.bf16.msra.mxu0 0
        %1909 = vmatprep.subr.bf16.mxu0 0
        %1910 = vmatpush1.bf16.msra.mxu0 0
        %1911 = vmatprep.subr.bf16.mxu0 0
        %1912 = vmatpush1.bf16.msra.mxu0 0
        %1913 = vmatprep.subr.bf16.mxu0 0
        %1914 = vmatpush1.bf16.msra.mxu0 0
        %1915 = vmatprep.subr.bf16.mxu0 0
        %1916 = vmatpush1.bf16.msra.mxu0 0
        %1917 = vmatprep.subr.bf16.mxu0 0
        %1918 = vmatpush1.bf16.msra.mxu0 0
        %1919 = vmatprep.subr.bf16.mxu0 0
        %1920 = vmatpush1.bf16.msra.mxu0 0
        %1921 = vmatprep.subr.bf16.mxu0 0
        %1922 = vmatpush1.bf16.msra.mxu0 0
        %1923 = vmatprep.subr.bf16.mxu0 0
        %1924 = vmatpush1.bf16.msra.mxu0 0
        %1925 = vmatprep.subr.bf16.mxu0 0
        %1926 = vmatpush1.bf16.msra.mxu0 0
        %1927 = vmatprep.mubr.bf16.mxu0 0
        %1928 = vmatmul.mubr.bf16.gmra.mrb[0].mxu0 %v1893
        %v1929 = vpop.f32.mrb[0].mxu0
        %v1930 = vadd.f32 %v1865, %v1929
        %v1931 = vpop.f32.mrb[0].mxu0
        %v1932 = vpop.f32.mrb[0].mxu0
        %v1933 = vpop.f32.mrb[0].mxu0
        %1934 = vdwg.mxu0
        %v1935 = vadd.f32 %v1757, %v1930
        %1936 = vst.msk [vmem:[%s513] sm:$0xff] %vm1711, %v1935
        %s1937 = sand.u32 %s274, 1
        %s1938 = scalar_lea.sflag [#allocation9], %s1937
        %s1939 = sand.u32 %s274, 1
        %s1940 = smul.addr %s1939, 8
        %s1941 = scalar_lea.vmem [#allocation24], %s1940
        // Predicated region
        $region105: #{tpu_custom_call.1} parent=59 // pred_check
          %p1942 = pneg %p284
        $region106: #{tpu_custom_call.1} parent=59 // pred_check_branch
          %1944 = sbr.rel (%p1942) target = $region108
        $region107: #{tpu_custom_call.1} parent=59 // pred_region
          %s1946 = ssub.s32 128, 128
          %1947 = vsyncadd %s1938, %s1946
          %s1948 = sadd.s32 %s42, %s41
          %s1949 = smul.addr %s1948, 128
          %s1950 = scalar_lea.hbm %s11, %s1949
          %s1952 = sshll.u32 %s1941, 4
          %s1953 = int_to_ptr.vmem [resolvable:$true] %s1952
          %1955 = dma.vmem_to_hbm [thread:$0]  %s1953, 128, %s1950, %s1938
        $region108: #{tpu_custom_call.1} parent=59 // pred_fallthru
          _
      $region60: #{tpu_custom_call.1} parent=5 // pred_fallthru
        _
      %p1956 = scmp.le.s32.totalorder 2, %s32
      // Predicated region
      $region109: #{tpu_custom_call.1} parent=5 // pred_check
        %p1957 = pneg %p1956
      $region110: #{tpu_custom_call.1} parent=5 // pred_check_branch
        %1959 = sbr.rel (%p1957) target = $region112
      $region111: #{tpu_custom_call.1} parent=5 // pred_region
        %s1960 = ssub.s32 %s32, 2
        // Predicated region
        $region113: #{tpu_custom_call.1} parent=111 // pred_check
          %p1961 = pneg %p290
        $region114: #{tpu_custom_call.1} parent=111 // pred_check_branch
          %1963 = sbr.rel (%p1961) target = $region116
        $region115: #{tpu_custom_call.1} parent=111 // pred_region
          %s1964 = sand.u32 %s275, 1
          %s1965 = scalar_lea.sflag [#allocation9], %s1964
          %s1966 = sand.u32 %s275, 1
          %s1967 = smul.addr %s1966, 8
          %s1968 = scalar_lea.vmem [#allocation24], %s1967
          %1969 = dma.done %s1965, 128
        $region116: #{tpu_custom_call.1} parent=111 // pred_fallthru
          _
      $region112: #{tpu_custom_call.1} parent=5 // pred_fallthru
        _
    $region6: #{tpu_custom_call.1} parent=1 // loop_footer
      %s36 = sadd.s32 1, %s32
    $region7: #{tpu_custom_call.1} parent=1 // loop_footer_branch
      %31 = sbr.rel target = $region3
    $region8: #{tpu_custom_call.1} parent=1 // loop_exit
      _
    %1970 = vsyncpa [#allocation8], 1
    %s1971 = scalar_lea.sflag [#allocation8], 1
    %1972 = vsyncpa %s1971, 1
    %1973 = vsyncpa [#allocation12], 1
    %1974 = vsyncpa [#allocation15], 1
    %1975 = vsyncpa [#allocation18], 1
    %1976 = vsyncpa [#allocation21], 1
    %1977 = vsyncpa [#allocation9], 1
    %s1978 = scalar_lea.sflag [#allocation9], 1
    %1979 = vsyncpa %s1978, 1
    %1980 = vsyncpa [#allocation10], 1
    %s1981 = scalar_lea.sflag [#allocation10], 1
    %1982 = vsyncpa %s1981, 1

</llo_original>
